<compile_context>
chip_gen: v7x
topology: tpu7x:2x2x1
jax: 0.10.0
libtpu: 0.0.40
codegen_flags: <defaults>
</compile_context>

<pallas_src>
import jax
import jax.numpy as jnp
from jax import lax
from jax.experimental import pallas as pl
from jax.experimental.pallas import tpu as pltpu


def _nonlocal_kernel(xk_ref, xq_ref, wkv_ref, bkv_ref, wt_ref, bt_ref,
                     ww_ref, bw_ref, out_ref):
    """One grid step == (batch element b, query tile q). Channels-first layout."""
    ci = wt_ref.shape[0]

    x_k = xk_ref[0]            # (C, N)   full spatial extent -> keys / values
    x_q = xq_ref[0]            # (C, TQ)  this query tile

    # Fused g/phi 1x1 convs over all key positions: one (2Ci, C) @ (C, N) MXU pass.
    kv = jnp.dot(wkv_ref[...], x_k, preferred_element_type=jnp.float32) + bkv_ref[...]
    g_x = kv[:ci]              # (Ci, N)
    phi = kv[ci:]              # (Ci, N)

    # theta 1x1 conv on the query tile only: (Ci, TQ)
    theta = jnp.dot(wt_ref[...], x_q, preferred_element_type=jnp.float32) + bt_ref[...]

    # f[q, k] = sum_ci theta[ci, q] * phi[ci, k]  -> (TQ, N)
    # Only a tiny (Ci, TQ) tensor is transposed; bf16 inputs + f32 accumulation.
    f = jnp.dot(theta.T.astype(jnp.bfloat16), phi.astype(jnp.bfloat16),
                preferred_element_type=jnp.float32)

    # softmax over keys (last / lane dim), numerically stabilized
    m = jnp.max(f, axis=-1, keepdims=True)
    p = jnp.exp(f - m)
    f_div = p * pl.reciprocal(jnp.sum(p, axis=-1, keepdims=True), approx=True)

    # y[ci, q] = sum_k g[ci, k] * f_div[q, k]  -> (Ci, TQ)
    # NT dot_general: contract the key dim of both operands, no big transpose.
    y = lax.dot_general(g_x.astype(jnp.bfloat16), f_div.astype(jnp.bfloat16),
                        (((1,), (1,)), ((), ())),
                        preferred_element_type=jnp.float32)

    # W 1x1 conv + residual: (C, TQ) lane-dense output tile
    w_y = jnp.dot(ww_ref[...], y, preferred_element_type=jnp.float32) + bw_ref[...]
    out_ref[0] = (w_y + x_q).astype(out_ref.dtype)


def _pick_query_tile(n):
    """Largest MXU-friendly query tile that divides N; fall back to full extent."""
    for t in (512, 256, 128):
        if n % t == 0:
            return t
    return n


def _vmem_limit_bytes():
    """Generation-aware scoped-VMEM limit with headroom (v7x has only 64 MiB physical)."""
    try:
        cap = int(pltpu.get_tpu_info().vmem_capacity_bytes)
    except Exception:
        cap = 64 * 1024 * 1024
    return (cap * 3) // 4


def nonlocal_block(x_nchw, params, *, query_tile=None):
    B, C, H, W = x_nchw.shape
    N = H * W
    Ci = params["w_t"].shape[0]

    # NCHW -> (B, C, N): channels-first, spatial flattened. Free reshape, no transpose.
    x_cf = x_nchw.reshape(B, C, N)

    tq = query_tile if query_tile is not None else _pick_query_tile(N)
    assert N % tq == 0, "query tile must divide H*W"
    n_q = N // tq

    grid_spec = pltpu.PrefetchScalarGridSpec(
        num_scalar_prefetch=0,
        grid=(B, n_q),
        in_specs=[
            pl.BlockSpec((1, C, N), lambda b, q: (b, 0, 0)),     # x: keys/values (full N)
            pl.BlockSpec((1, C, tq), lambda b, q: (b, 0, q)),    # x: query tile
            pl.BlockSpec((2 * Ci, C), lambda b, q: (0, 0)),      # fused g/phi weight
            pl.BlockSpec((2 * Ci, 1), lambda b, q: (0, 0)),      # fused g/phi bias
            pl.BlockSpec((Ci, C), lambda b, q: (0, 0)),          # theta weight
            pl.BlockSpec((Ci, 1), lambda b, q: (0, 0)),          # theta bias
            pl.BlockSpec((C, Ci), lambda b, q: (0, 0)),          # W weight
            pl.BlockSpec((C, 1), lambda b, q: (0, 0)),           # W bias
        ],
        out_specs=pl.BlockSpec((1, C, tq), lambda b, q: (b, 0, q)),
    )

    out_cf = pl.pallas_call(
        _nonlocal_kernel,
        out_shape=jax.ShapeDtypeStruct((B, C, N), x_cf.dtype),
        grid_spec=grid_spec,
        compiler_params=pltpu.CompilerParams(
            dimension_semantics=("parallel", "parallel"),
            vmem_limit_bytes=_vmem_limit_bytes(),
        ),
    )(x_cf, x_cf,
      params["w_kv"], params["b_kv"], params["w_t"], params["b_t"],
      params["w_w"], params["b_w"])

    return out_cf.reshape(B, C, H, W)


def nonlocal_block_ref(x_nchw, params, match_kernel_precision=False):
    """Pure-JAX reference mirroring the PyTorch forward.

    If match_kernel_precision, the two N^2 matmuls are fed bf16 inputs (f32 accumulate)
    exactly like the kernel, so the comparison isolates kernel correctness from the
    (intentional) bf16 drift.
    """
    B, C, H, W = x_nchw.shape
    N = H * W
    Ci = params["w_t"].shape[0]
    x = x_nchw.reshape(B, C, N)                                              # (B, C, N)

    kv = jnp.einsum("oc,bcn->bon", params["w_kv"], x) + params["b_kv"]       # (B, 2Ci, N)
    g_x, phi = kv[:, :Ci], kv[:, Ci:]
    theta = jnp.einsum("oc,bcn->bon", params["w_t"], x) + params["b_t"]      # (B, Ci, N)

    th, ph = theta, phi
    if match_kernel_precision:
        th, ph = th.astype(jnp.bfloat16), ph.astype(jnp.bfloat16)
    f = jnp.einsum("bcq,bck->bqk", th, ph,
                   preferred_element_type=jnp.float32)                       # (B, N, N)
    f_div = jax.nn.softmax(f, axis=-1)

    fd, g = f_div, g_x
    if match_kernel_precision:
        fd, g = fd.astype(jnp.bfloat16), g.astype(jnp.bfloat16)
    y = jnp.einsum("bck,bqk->bcq", g, fd,
                   preferred_element_type=jnp.float32)                       # (B, Ci, N)

    w_y = jnp.einsum("oc,bcn->bon", params["w_w"], y) + params["b_w"]        # (B, C, N)
    return (w_y + x).reshape(B, C, H, W)


def make_params(key, in_channels, inter_channels, zero_init_w=True):
    """Weights stored PyTorch-conv style (out_ch, in_ch); g & phi concatenated.
    zero_init_w=True matches the module __init__ (W weight/bias zero-initialized)."""
    kg, kbg, kt, kbt, kp_, kbp = jax.random.split(key, 6)
    s = 1.0 / (in_channels ** 0.5)
    wg = jax.random.normal(kg, (inter_channels, in_channels), jnp.float32) * s
    bg = jax.random.normal(kbg, (inter_channels, 1), jnp.float32) * s
    wp = jax.random.normal(kp_, (inter_channels, in_channels), jnp.float32) * s
    bp = jax.random.normal(kbp, (inter_channels, 1), jnp.float32) * s
    wt = jax.random.normal(kt, (inter_channels, in_channels), jnp.float32) * s
    bt = jax.random.normal(kbt, (inter_channels, 1), jnp.float32) * s
    if zero_init_w:
        ww = jnp.zeros((in_channels, inter_channels), jnp.float32)
        bw = jnp.zeros((in_channels, 1), jnp.float32)
    else:
        kw, kbw = jax.random.split(jax.random.fold_in(key, 7))
        sw = 1.0 / (inter_channels ** 0.5)
        ww = jax.random.normal(kw, (in_channels, inter_channels), jnp.float32) * sw
        bw = jax.random.normal(kbw, (in_channels, 1), jnp.float32) * sw
    return {
        "w_kv": jnp.concatenate([wg, wp], axis=0),   # (2Ci, C): rows [0:Ci]=g, [Ci:2Ci]=phi
        "b_kv": jnp.concatenate([bg, bp], axis=0),   # (2Ci, 1)
        "w_t": wt, "b_t": bt,                        # (Ci, C), (Ci, 1)
        "w_w": ww, "b_w": bw,                        # (C, Ci), (C, 1)
    }


if __name__ == "__main__":
    B, C, H, W = 2, 8, 16, 16
    inter_channels = 4

    key = jax.random.PRNGKey(0)
    kx, kp = jax.random.split(key)
    x = jax.random.normal(kx, (B, C, H, W), jnp.float32)

    # Case 1: module-faithful init (W conv zero-initialized) -> forward reduces to identity.
    params0 = make_params(kp, C, inter_channels, zero_init_w=True)
    out0 = jax.block_until_ready(nonlocal_block(x, params0))
    assert out0.shape == x.shape
    assert jnp.allclose(out0, x, atol=1e-6, rtol=1e-6), "zero-W case should equal input"

    # Case 2: non-zero W so the attention path actually contributes to the output.
    params1 = make_params(kp, C, inter_channels, zero_init_w=False)
    out1 = jax.block_until_ready(nonlocal_block(x, params1))
    ref_match = nonlocal_block_ref(x, params1, match_kernel_precision=True)
    ref_f32 = nonlocal_block_ref(x, params1, match_kernel_precision=False)
    # tight check vs a reference using the same bf16 matmul inputs (approx-reciprocal slack)
    assert jnp.allclose(out1, ref_match, atol=2e-2, rtol=2e-2), "mismatch vs matched-precision ref"
    # loose sanity check vs the full-f32 reference (bf16 drift is expected and small)
    assert jnp.allclose(out1, ref_f32, atol=1e-1, rtol=1e-1), "mismatch vs f32 reference"

    print("KERNEL_OK")
</pallas_src>

<mosaic_0001>
module attributes {stable_mosaic.version = 11 : i64} {
  func.func @_nonlocal_kernel(%arg0: i32, %arg1: i32, %arg2: memref<1x8x256xf32, #tpu.memory_space<vmem>>, %arg3: memref<1x8x256xf32, #tpu.memory_space<vmem>>, %arg4: memref<8x8xf32, #tpu.memory_space<vmem>>, %arg5: memref<8x1xf32, #tpu.memory_space<vmem>>, %arg6: memref<4x8xf32, #tpu.memory_space<vmem>>, %arg7: memref<4x1xf32, #tpu.memory_space<vmem>>, %arg8: memref<8x4xf32, #tpu.memory_space<vmem>>, %arg9: memref<8x1xf32, #tpu.memory_space<vmem>>, %arg10: memref<1x8x256xf32, #tpu.memory_space<vmem>>) attributes {dimension_semantics = [#tpu.dimension_semantics<parallel>, #tpu.dimension_semantics<parallel>], iteration_bounds = array<i64: 2, 1>, scalar_prefetch = 0 : i64, scratch_operands = 0 : i64, tpu.core_type = #tpu.core_type<tc>, window_params = [{transform_indices = @transform_0, window_bounds = array<i64: 1, 8, 256>}, {transform_indices = @transform_1, window_bounds = array<i64: 1, 8, 256>}, {pipeline_mode = #tpu.pipeline_mode<synchronous>, transform_indices = @transform_2, window_bounds = array<i64: 8, 8>}, {pipeline_mode = #tpu.pipeline_mode<synchronous>, transform_indices = @transform_3, window_bounds = array<i64: 8, 1>}, {pipeline_mode = #tpu.pipeline_mode<synchronous>, transform_indices = @transform_4, window_bounds = array<i64: 4, 8>}, {pipeline_mode = #tpu.pipeline_mode<synchronous>, transform_indices = @transform_5, window_bounds = array<i64: 4, 1>}, {pipeline_mode = #tpu.pipeline_mode<synchronous>, transform_indices = @transform_6, window_bounds = array<i64: 8, 4>}, {pipeline_mode = #tpu.pipeline_mode<synchronous>, transform_indices = @transform_7, window_bounds = array<i64: 8, 1>}, {transform_indices = @transform_8, window_bounds = array<i64: 1, 8, 256>}]} {
    %c0 = arith.constant 0 : index
    %c0_0 = arith.constant 0 : index
    %c0_1 = arith.constant 0 : index
    %0 = vector.load %arg2[%c0, %c0_0, %c0_1] : memref<1x8x256xf32, #tpu.memory_space<vmem>>, vector<1x8x256xf32>
    %1 = vector.shape_cast %0 : vector<1x8x256xf32> to vector<8x256xf32>
    %c0_2 = arith.constant 0 : index
    %c0_3 = arith.constant 0 : index
    %c0_4 = arith.constant 0 : index
    %2 = vector.load %arg3[%c0_2, %c0_3, %c0_4] : memref<1x8x256xf32, #tpu.memory_space<vmem>>, vector<1x8x256xf32>
    %3 = vector.shape_cast %2 : vector<1x8x256xf32> to vector<8x256xf32>
    %c0_5 = arith.constant 0 : index
    %c0_6 = arith.constant 0 : index
    %4 = vector.load %arg4[%c0_5, %c0_6] : memref<8x8xf32, #tpu.memory_space<vmem>>, vector<8x8xf32>
    %cst = arith.constant dense<0.000000e+00> : vector<8x256xf32>
    %5 = tpu.matmul %4, %1, %cst {dimension_numbers = #tpu.dot_dimension_numbers<[1], [0], [0], [1], [0, 0, 1, 1], [], []>} : vector<8x8xf32>, vector<8x256xf32>, vector<8x256xf32> -> vector<8x256xf32>
    %c0_7 = arith.constant 0 : index
    %c0_8 = arith.constant 0 : index
    %6 = vector.load %arg5[%c0_7, %c0_8] : memref<8x1xf32, #tpu.memory_space<vmem>>, vector<8x1xf32>
    %7 = vector.broadcast %6 : vector<8x1xf32> to vector<8x256xf32>
    %8 = arith.addf %5, %7 : vector<8x256xf32>
    %9 = vector.extract_strided_slice %8 {offsets = [0, 0], sizes = [4, 256], strides = [1, 1]} : vector<8x256xf32> to vector<4x256xf32>
    %10 = vector.extract_strided_slice %8 {offsets = [4, 0], sizes = [4, 256], strides = [1, 1]} : vector<8x256xf32> to vector<4x256xf32>
    %c0_9 = arith.constant 0 : index
    %c0_10 = arith.constant 0 : index
    %11 = vector.load %arg6[%c0_9, %c0_10] : memref<4x8xf32, #tpu.memory_space<vmem>>, vector<4x8xf32>
    %cst_11 = arith.constant dense<0.000000e+00> : vector<4x256xf32>
    %12 = tpu.matmul %11, %3, %cst_11 {dimension_numbers = #tpu.dot_dimension_numbers<[1], [0], [0], [1], [0, 0, 1, 1], [], []>} : vector<4x8xf32>, vector<8x256xf32>, vector<4x256xf32> -> vector<4x256xf32>
    %c0_12 = arith.constant 0 : index
    %c0_13 = arith.constant 0 : index
    %13 = vector.load %arg7[%c0_12, %c0_13] : memref<4x1xf32, #tpu.memory_space<vmem>>, vector<4x1xf32>
    %14 = vector.broadcast %13 : vector<4x1xf32> to vector<4x256xf32>
    %15 = arith.addf %12, %14 : vector<4x256xf32>
    %16 = tpu.transpose %15, [1, 0] : vector<4x256xf32> -> vector<256x4xf32>
    %17 = arith.truncf %16 : vector<256x4xf32> to vector<256x4xbf16>
    %18 = arith.truncf %10 : vector<4x256xf32> to vector<4x256xbf16>
    %cst_14 = arith.constant dense<0.000000e+00> : vector<256x256xf32>
    %19 = tpu.matmul %17, %18, %cst_14 {dimension_numbers = #tpu.dot_dimension_numbers<[1], [0], [0], [1], [0, 0, 1, 1], [], []>} : vector<256x4xbf16>, vector<4x256xbf16>, vector<256x256xf32> -> vector<256x256xf32>
    %cst_15 = arith.constant dense<0xFF800000> : vector<256xf32>
    %20 = vector.multi_reduction <maximumf>, %19, %cst_15 [1] : vector<256x256xf32> to vector<256xf32>
    %21 = vector.shape_cast %20 : vector<256xf32> to vector<256x1xf32>
    %22 = vector.broadcast %21 : vector<256x1xf32> to vector<256x256xf32>
    %23 = arith.subf %19, %22 : vector<256x256xf32>
    %24 = math.exp %23 : vector<256x256xf32>
    %cst_16 = arith.constant dense<0.000000e+00> : vector<256xf32>
    %25 = vector.multi_reduction <add>, %24, %cst_16 [1] : vector<256x256xf32> to vector<256xf32>
    %26 = vector.shape_cast %25 : vector<256xf32> to vector<256x1xf32>
    %27 = tpu.reciprocal %26 {approx = true} : vector<256x1xf32> -> vector<256x1xf32>
    %28 = vector.broadcast %27 : vector<256x1xf32> to vector<256x256xf32>
    %29 = arith.mulf %24, %28 : vector<256x256xf32>
    %30 = arith.truncf %9 : vector<4x256xf32> to vector<4x256xbf16>
    %31 = arith.truncf %29 : vector<256x256xf32> to vector<256x256xbf16>
    %cst_17 = arith.constant dense<0.000000e+00> : vector<4x256xf32>
    %32 = tpu.matmul %30, %31, %cst_17 {dimension_numbers = #tpu.dot_dimension_numbers<[1], [1], [0], [0], [0, 0, 1, 0], [], []>} : vector<4x256xbf16>, vector<256x256xbf16>, vector<4x256xf32> -> vector<4x256xf32>
    %c0_18 = arith.constant 0 : index
    %c0_19 = arith.constant 0 : index
    %33 = vector.load %arg8[%c0_18, %c0_19] : memref<8x4xf32, #tpu.memory_space<vmem>>, vector<8x4xf32>
    %cst_20 = arith.constant dense<0.000000e+00> : vector<8x256xf32>
    %34 = tpu.matmul %33, %32, %cst_20 {dimension_numbers = #tpu.dot_dimension_numbers<[1], [0], [0], [1], [0, 0, 1, 1], [], []>} : vector<8x4xf32>, vector<4x256xf32>, vector<8x256xf32> -> vector<8x256xf32>
    %c0_21 = arith.constant 0 : index
    %c0_22 = arith.constant 0 : index
    %35 = vector.load %arg9[%c0_21, %c0_22] : memref<8x1xf32, #tpu.memory_space<vmem>>, vector<8x1xf32>
    %36 = vector.broadcast %35 : vector<8x1xf32> to vector<8x256xf32>
    %37 = arith.addf %34, %36 : vector<8x256xf32>
    %38 = arith.addf %37, %3 : vector<8x256xf32>
    %c0_23 = arith.constant 0 : index
    %c0_24 = arith.constant 0 : index
    %c0_25 = arith.constant 0 : index
    %39 = vector.load %arg10[%c0_23, %c0_24, %c0_25] : memref<1x8x256xf32, #tpu.memory_space<vmem>>, vector<1x8x256xf32>
    %40 = vector.shape_cast %39 : vector<1x8x256xf32> to vector<8x256xf32>
    %41 = vector.shape_cast %38 : vector<8x256xf32> to vector<1x8x256xf32>
    tpu.vector_store %arg10[%c0_23, %c0_24, %c0_25], %41 {strides = array<i32>} : memref<1x8x256xf32, #tpu.memory_space<vmem>>, vector<1x8x256xf32>,
    return
  }
  func.func @transform_0(%arg0: i32, %arg1: i32) -> (i32, i32, i32) {
    %c0_i32 = arith.constant 0 : i32
    %c0_i32_0 = arith.constant 0 : i32
    %c0_i32_1 = arith.constant 0 : i32
    return %arg0, %c0_i32, %c0_i32_0 : i32, i32, i32
  }
  func.func @transform_1(%arg0: i32, %arg1: i32) -> (i32, i32, i32) {
    %c0_i32 = arith.constant 0 : i32
    %c0_i32_0 = arith.constant 0 : i32
    return %arg0, %c0_i32, %arg1 : i32, i32, i32
  }
  func.func @transform_2(%arg0: i32, %arg1: i32) -> (i32, i32) {
    %c0_i32 = arith.constant 0 : i32
    %c0_i32_0 = arith.constant 0 : i32
    %c0_i32_1 = arith.constant 0 : i32
    return %c0_i32, %c0_i32_0 : i32, i32
  }
  func.func @transform_3(%arg0: i32, %arg1: i32) -> (i32, i32) {
    %c0_i32 = arith.constant 0 : i32
    %c0_i32_0 = arith.constant 0 : i32
    %c0_i32_1 = arith.constant 0 : i32
    return %c0_i32, %c0_i32_0 : i32, i32
  }
  func.func @transform_4(%arg0: i32, %arg1: i32) -> (i32, i32) {
    %c0_i32 = arith.constant 0 : i32
    %c0_i32_0 = arith.constant 0 : i32
    %c0_i32_1 = arith.constant 0 : i32
    return %c0_i32, %c0_i32_0 : i32, i32
  }
  func.func @transform_5(%arg0: i32, %arg1: i32) -> (i32, i32) {
    %c0_i32 = arith.constant 0 : i32
    %c0_i32_0 = arith.constant 0 : i32
    %c0_i32_1 = arith.constant 0 : i32
    return %c0_i32, %c0_i32_0 : i32, i32
  }
  func.func @transform_6(%arg0: i32, %arg1: i32) -> (i32, i32) {
    %c0_i32 = arith.constant 0 : i32
    %c0_i32_0 = arith.constant 0 : i32
    %c0_i32_1 = arith.constant 0 : i32
    return %c0_i32, %c0_i32_0 : i32, i32
  }
  func.func @transform_7(%arg0: i32, %arg1: i32) -> (i32, i32) {
    %c0_i32 = arith.constant 0 : i32
    %c0_i32_0 = arith.constant 0 : i32
    %c0_i32_1 = arith.constant 0 : i32
    return %c0_i32, %c0_i32_0 : i32, i32
  }
  func.func @transform_8(%arg0: i32, %arg1: i32) -> (i32, i32, i32) {
    %c0_i32 = arith.constant 0 : i32
    %c0_i32_0 = arith.constant 0 : i32
    return %arg0, %c0_i32, %arg1 : i32, i32, i32
  }
}

</mosaic_0001>

<llo_original>
// kernel: tpu_custom_call.1
$region0: #{tpu_custom_call.1}
  #allocation0 [shape = 'u32[]', space=smem, size = 0x4, offset = 0x4, fixed_abs, tag = 'smem constant byte address 0x4 - core index']
  #allocation1 [shape = 'u32[144,128]{1,0:T(1,128)}', space=vmem, size = 0x12000, scoped, tag = 'internal scratch']
  %s0 = inlined_call_operand.vmem [shape: f32[2,8,256], index: 0, kind: input, shape index: {}]
  %s1 = inlined_call_operand.hbm [shape: f32[2,8,256], index: 1, kind: input, shape index: {}]
  %s2 = inlined_call_operand.vmem [shape: f32[8,8], index: 2, kind: input, shape index: {}]
  %s3 = inlined_call_operand.vmem [shape: f32[8,1], index: 3, kind: input, shape index: {}]
  %s4 = inlined_call_operand.vmem [shape: f32[4,8], index: 4, kind: input, shape index: {}]
  %s5 = inlined_call_operand.vmem [shape: f32[4,1], index: 5, kind: input, shape index: {}]
  %s6 = inlined_call_operand.vmem [shape: f32[8,4], index: 6, kind: input, shape index: {}]
  %s7 = inlined_call_operand.vmem [shape: f32[8,1], index: 7, kind: input, shape index: {}]
  %s8 = inlined_call_operand.hbm [shape: f32[2,8,256], index: 8, kind: output, shape index: {}]
  %s9 = sld [smem:[#allocation0]]
  $region69: #{tpu_custom_call.1} parent=0
    _
  %s11 = ssub.s32 1, %s9
  %s12 = scalar_select 0, %s11, %s9
  $region1: #{tpu_custom_call.1} parent=0
    #allocation2 [shape = 'u8[16384]{0}', space=vmem, size = 0x4000, scoped, tag = 'input window, operand 1']
    #allocation3 [shape = 's32[2]{0}', space=sflag, size = 0x8, scoped, tag = 'scoped memory for tpu_custom_call.1']
    #allocation4 [shape = 's32[2]{0}', space=sflag, size = 0x8, scoped, tag = 'scoped memory for tpu_custom_call.1']
    #allocation5 [shape = 'u8[16384]{0}', space=vmem, size = 0x4000, scoped, tag = 'output window, operand 0']
    %13 = vsyncpa [#allocation3], 0
    %s14 = scalar_lea.sflag [#allocation3], 1
    %15 = vsyncpa %s14, 0
    %16 = vsyncpa [#allocation4], 0
    %s17 = scalar_lea.sflag [#allocation4], 1
    %18 = vsyncpa %s17, 0
    loop: start=0, step=1, limit=4
    $region2: #{tpu_custom_call.1} parent=1 // loop_pre_header
      _
    $region3: #{tpu_custom_call.1} parent=1 // loop_header
      %s20 = sphi 0, %s24
      %p21 = scmp.ge.s32.totalorder %s20, 4
      %s27 = sphi 0, %s39
      %s28 = sphi 0, %s35
      %s29 = sphi 0, %s27
      %s30 = sphi 0, %s28
      %s31 = sphi 0, %s29
      %s32 = sphi 0, %s30
      %s42 = sphi 0, %s44
      %s45 = sphi 0, %s42
      %s46 = sphi 0, %s45
      %s62 = sphi 0, %s46
      %s70 = sphi 0, %s72
      %s73 = sphi 0, %s70
      %s74 = sphi 0, %s73
      %s90 = sphi 0, %s74
      %s94 = sphi 0, %s94
      %s96 = sphi 0, %s94
      %s97 = sphi 0, %s96
      %s111 = sphi 0, %s97
      %s115 = sphi 0, %s115
      %s117 = sphi 0, %s115
      %s118 = sphi 0, %s117
      %s132 = sphi 0, %s118
      %s136 = sphi 0, %s136
      %s138 = sphi 0, %s136
      %s139 = sphi 0, %s138
      %s153 = sphi 0, %s139
      %s157 = sphi 0, %s157
      %s159 = sphi 0, %s157
      %s160 = sphi 0, %s159
      %s174 = sphi 0, %s160
      %s178 = sphi 0, %s178
      %s180 = sphi 0, %s178
      %s181 = sphi 0, %s180
      %s195 = sphi 0, %s181
      %s199 = sphi 0, %s199
      %s201 = sphi 0, %s199
      %s202 = sphi 0, %s201
      %s216 = sphi 0, %s202
      %s224 = sphi 0, %s226
      %s227 = sphi 0, %s224
      %s228 = sphi 0, %s227
      %s244 = sphi 0, %s228
    $region4: #{tpu_custom_call.1} parent=1 // loop_header_branch
      %23 = sbr.rel (%p21) target = $region8
    $region5: #{tpu_custom_call.1} parent=1 // loop_body
      %s25 = ssub.s32 %s20, 1
      %s26 = ssub.s32 %s20, 2
      %s33 = sadd.s32 1, %s28
      %p34 = scmp.ge.s32.totalorder %s33, 1
      %s35 = scalar_select %p34, 0, %s33
      %s36 = sadd.s32 1, %s27
      %s37 = scalar_select %p34, %s36, %s27
      %p38 = scmp.ge.s32.totalorder %s37, 2
      %s39 = scalar_select %p38, 0, %s37
      %s40 = ssub.s32 %s27, %s39
      %p41 = scmp.eq.s32.totalorder %s40, 0
      %s43 = sadd.s32 %s42, 1
      %s44 = scalar_select %p41, %s42, %s43
      %p47 = pneg %p41
      %p48 = scmp.eq.s32.totalorder %s20, 1
      %p49 = por %p47, %p48
      %p50 = scmp.ne.s32.totalorder %s42, %s45
      %p51 = scmp.eq.s32.totalorder %s20, 0
      %p52 = por %p50, %p51
      %p53 = scmp.ne.s32.totalorder %s42, %s45
      %p54 = scmp.eq.s32.totalorder %s25, 1
      %p55 = por %p53, %p54
      %p56 = scmp.ne.s32.totalorder %s45, %s46
      %p57 = scmp.eq.s32.totalorder %s25, 0
      %p58 = por %p56, %p57
      %p59 = scmp.ne.s32.totalorder %s45, %s46
      %p60 = scmp.eq.s32.totalorder %s26, 1
      %p61 = por %p59, %p60
      %p63 = scmp.ne.s32.totalorder %s46, %s62
      %p64 = scmp.eq.s32.totalorder %s26, 0
      %p65 = por %p63, %p64
      %s66 = ssub.s32 %s27, %s39
      %s67 = ssub.s32 %s28, %s35
      %s68 = sor.u32 %s66, %s67
      %p69 = scmp.eq.s32.totalorder %s68, 0
      %s71 = sadd.s32 %s70, 1
      %s72 = scalar_select %p69, %s70, %s71
      %p75 = pneg %p69
      %p76 = scmp.eq.s32.totalorder %s20, 1
      %p77 = por %p75, %p76
      %p78 = scmp.ne.s32.totalorder %s70, %s73
      %p79 = scmp.eq.s32.totalorder %s20, 0
      %p80 = por %p78, %p79
      %p81 = scmp.ne.s32.totalorder %s70, %s73
      %p82 = scmp.eq.s32.totalorder %s25, 1
      %p83 = por %p81, %p82
      %p84 = scmp.ne.s32.totalorder %s73, %s74
      %p85 = scmp.eq.s32.totalorder %s25, 0
      %p86 = por %p84, %p85
      %p87 = scmp.ne.s32.totalorder %s73, %s74
      %p88 = scmp.eq.s32.totalorder %s26, 1
      %p89 = por %p87, %p88
      %p91 = scmp.ne.s32.totalorder %s74, %s90
      %p92 = scmp.eq.s32.totalorder %s26, 0
      %p93 = por %p91, %p92
      %s95 = sadd.s32 %s94, 1
      %p98 = scmp.eq.s32.totalorder %s20, 1
      %p99 = scmp.ne.s32.totalorder %s94, %s96
      %p100 = scmp.eq.s32.totalorder %s20, 0
      %p101 = por %p99, %p100
      %p102 = scmp.ne.s32.totalorder %s94, %s96
      %p103 = scmp.eq.s32.totalorder %s25, 1
      %p104 = por %p102, %p103
      %p105 = scmp.ne.s32.totalorder %s96, %s97
      %p106 = scmp.eq.s32.totalorder %s25, 0
      %p107 = por %p105, %p106
      %p108 = scmp.ne.s32.totalorder %s96, %s97
      %p109 = scmp.eq.s32.totalorder %s26, 1
      %p110 = por %p108, %p109
      %p112 = scmp.ne.s32.totalorder %s97, %s111
      %p113 = scmp.eq.s32.totalorder %s26, 0
      %p114 = por %p112, %p113
      %s116 = sadd.s32 %s115, 1
      %p119 = scmp.eq.s32.totalorder %s20, 1
      %p120 = scmp.ne.s32.totalorder %s115, %s117
      %p121 = scmp.eq.s32.totalorder %s20, 0
      %p122 = por %p120, %p121
      %p123 = scmp.ne.s32.totalorder %s115, %s117
      %p124 = scmp.eq.s32.totalorder %s25, 1
      %p125 = por %p123, %p124
      %p126 = scmp.ne.s32.totalorder %s117, %s118
      %p127 = scmp.eq.s32.totalorder %s25, 0
      %p128 = por %p126, %p127
      %p129 = scmp.ne.s32.totalorder %s117, %s118
      %p130 = scmp.eq.s32.totalorder %s26, 1
      %p131 = por %p129, %p130
      %p133 = scmp.ne.s32.totalorder %s118, %s132
      %p134 = scmp.eq.s32.totalorder %s26, 0
      %p135 = por %p133, %p134
      %s137 = sadd.s32 %s136, 1
      %p140 = scmp.eq.s32.totalorder %s20, 1
      %p141 = scmp.ne.s32.totalorder %s136, %s138
      %p142 = scmp.eq.s32.totalorder %s20, 0
      %p143 = por %p141, %p142
      %p144 = scmp.ne.s32.totalorder %s136, %s138
      %p145 = scmp.eq.s32.totalorder %s25, 1
      %p146 = por %p144, %p145
      %p147 = scmp.ne.s32.totalorder %s138, %s139
      %p148 = scmp.eq.s32.totalorder %s25, 0
      %p149 = por %p147, %p148
      %p150 = scmp.ne.s32.totalorder %s138, %s139
      %p151 = scmp.eq.s32.totalorder %s26, 1
      %p152 = por %p150, %p151
      %p154 = scmp.ne.s32.totalorder %s139, %s153
      %p155 = scmp.eq.s32.totalorder %s26, 0
      %p156 = por %p154, %p155
      %s158 = sadd.s32 %s157, 1
      %p161 = scmp.eq.s32.totalorder %s20, 1
      %p162 = scmp.ne.s32.totalorder %s157, %s159
      %p163 = scmp.eq.s32.totalorder %s20, 0
      %p164 = por %p162, %p163
      %p165 = scmp.ne.s32.totalorder %s157, %s159
      %p166 = scmp.eq.s32.totalorder %s25, 1
      %p167 = por %p165, %p166
      %p168 = scmp.ne.s32.totalorder %s159, %s160
      %p169 = scmp.eq.s32.totalorder %s25, 0
      %p170 = por %p168, %p169
      %p171 = scmp.ne.s32.totalorder %s159, %s160
      %p172 = scmp.eq.s32.totalorder %s26, 1
      %p173 = por %p171, %p172
      %p175 = scmp.ne.s32.totalorder %s160, %s174
      %p176 = scmp.eq.s32.totalorder %s26, 0
      %p177 = por %p175, %p176
      %s179 = sadd.s32 %s178, 1
      %p182 = scmp.eq.s32.totalorder %s20, 1
      %p183 = scmp.ne.s32.totalorder %s178, %s180
      %p184 = scmp.eq.s32.totalorder %s20, 0
      %p185 = por %p183, %p184
      %p186 = scmp.ne.s32.totalorder %s178, %s180
      %p187 = scmp.eq.s32.totalorder %s25, 1
      %p188 = por %p186, %p187
      %p189 = scmp.ne.s32.totalorder %s180, %s181
      %p190 = scmp.eq.s32.totalorder %s25, 0
      %p191 = por %p189, %p190
      %p192 = scmp.ne.s32.totalorder %s180, %s181
      %p193 = scmp.eq.s32.totalorder %s26, 1
      %p194 = por %p192, %p193
      %p196 = scmp.ne.s32.totalorder %s181, %s195
      %p197 = scmp.eq.s32.totalorder %s26, 0
      %p198 = por %p196, %p197
      %s200 = sadd.s32 %s199, 1
      %p203 = scmp.eq.s32.totalorder %s20, 1
      %p204 = scmp.ne.s32.totalorder %s199, %s201
      %p205 = scmp.eq.s32.totalorder %s20, 0
      %p206 = por %p204, %p205
      %p207 = scmp.ne.s32.totalorder %s199, %s201
      %p208 = scmp.eq.s32.totalorder %s25, 1
      %p209 = por %p207, %p208
      %p210 = scmp.ne.s32.totalorder %s201, %s202
      %p211 = scmp.eq.s32.totalorder %s25, 0
      %p212 = por %p210, %p211
      %p213 = scmp.ne.s32.totalorder %s201, %s202
      %p214 = scmp.eq.s32.totalorder %s26, 1
      %p215 = por %p213, %p214
      %p217 = scmp.ne.s32.totalorder %s202, %s216
      %p218 = scmp.eq.s32.totalorder %s26, 0
      %p219 = por %p217, %p218
      %s220 = ssub.s32 %s27, %s39
      %s221 = ssub.s32 %s28, %s35
      %s222 = sor.u32 %s220, %s221
      %p223 = scmp.eq.s32.totalorder %s222, 0
      %s225 = sadd.s32 %s224, 1
      %s226 = scalar_select %p223, %s224, %s225
      %p229 = pneg %p223
      %p230 = scmp.eq.s32.totalorder %s20, 1
      %p231 = por %p229, %p230
      %p232 = scmp.ne.s32.totalorder %s224, %s227
      %p233 = scmp.eq.s32.totalorder %s20, 0
      %p234 = por %p232, %p233
      %p235 = scmp.ne.s32.totalorder %s224, %s227
      %p236 = scmp.eq.s32.totalorder %s25, 1
      %p237 = por %p235, %p236
      %p238 = scmp.ne.s32.totalorder %s227, %s228
      %p239 = scmp.eq.s32.totalorder %s25, 0
      %p240 = por %p238, %p239
      %p241 = scmp.ne.s32.totalorder %s227, %s228
      %p242 = scmp.eq.s32.totalorder %s26, 1
      %p243 = por %p241, %p242
      %p245 = scmp.ne.s32.totalorder %s228, %s244
      %p246 = scmp.eq.s32.totalorder %s26, 0
      %p247 = por %p245, %p246
      %p248 = scmp.le.s32.totalorder 1, %s20
      %p249 = scmp.lt.s32.totalorder %s20, 3
      %p250 = pnand %p248, %p249
      %p251 = pneg %p250
      // Predicated region
      $region9: #{tpu_custom_call.1} parent=5 // pred_check
        _
      $region10: #{tpu_custom_call.1} parent=5 // pred_check_branch
        %253 = sbr.rel (%p250) target = $region12
      $region11: #{tpu_custom_call.1} parent=5 // pred_region
        %s254 = ssub.s32 %s20, 1
        // Predicated region
        $region13: #{tpu_custom_call.1} parent=11 // pred_check
          %p255 = pneg %p107
        $region14: #{tpu_custom_call.1} parent=11 // pred_check_branch
          %257 = sbr.rel (%p255) target = $region16
        $region15: #{tpu_custom_call.1} parent=11 // pred_region
          _
        $region16: #{tpu_custom_call.1} parent=11 // pred_fallthru
          _
        // Predicated region
        $region17: #{tpu_custom_call.1} parent=11 // pred_check
          %p258 = pneg %p128
        $region18: #{tpu_custom_call.1} parent=11 // pred_check_branch
          %260 = sbr.rel (%p258) target = $region20
        $region19: #{tpu_custom_call.1} parent=11 // pred_region
          _
        $region20: #{tpu_custom_call.1} parent=11 // pred_fallthru
          _
        // Predicated region
        $region21: #{tpu_custom_call.1} parent=11 // pred_check
          %p261 = pneg %p149
        $region22: #{tpu_custom_call.1} parent=11 // pred_check_branch
          %263 = sbr.rel (%p261) target = $region24
        $region23: #{tpu_custom_call.1} parent=11 // pred_region
          _
        $region24: #{tpu_custom_call.1} parent=11 // pred_fallthru
          _
        // Predicated region
        $region25: #{tpu_custom_call.1} parent=11 // pred_check
          %p264 = pneg %p170
        $region26: #{tpu_custom_call.1} parent=11 // pred_check_branch
          %266 = sbr.rel (%p264) target = $region28
        $region27: #{tpu_custom_call.1} parent=11 // pred_region
          _
        $region28: #{tpu_custom_call.1} parent=11 // pred_fallthru
          _
        // Predicated region
        $region29: #{tpu_custom_call.1} parent=11 // pred_check
          %p267 = pneg %p191
        $region30: #{tpu_custom_call.1} parent=11 // pred_check_branch
          %269 = sbr.rel (%p267) target = $region32
        $region31: #{tpu_custom_call.1} parent=11 // pred_region
          _
        $region32: #{tpu_custom_call.1} parent=11 // pred_fallthru
          _
        // Predicated region
        $region33: #{tpu_custom_call.1} parent=11 // pred_check
          %p270 = pneg %p212
        $region34: #{tpu_custom_call.1} parent=11 // pred_check_branch
          %272 = sbr.rel (%p270) target = $region36
        $region35: #{tpu_custom_call.1} parent=11 // pred_region
          _
        $region36: #{tpu_custom_call.1} parent=11 // pred_fallthru
          _
      $region12: #{tpu_custom_call.1} parent=5 // pred_fallthru
        _
      %p273 = scmp.lt.s32.totalorder %s20, 2
      // Predicated region
      $region37: #{tpu_custom_call.1} parent=5 // pred_check
        %p274 = pneg %p273
      $region38: #{tpu_custom_call.1} parent=5 // pred_check_branch
        %276 = sbr.rel (%p274) target = $region40
      $region39: #{tpu_custom_call.1} parent=5 // pred_region
        // Predicated region
        $region41: #{tpu_custom_call.1} parent=39 // pred_check
          %p277 = pneg %p52
        $region42: #{tpu_custom_call.1} parent=39 // pred_check_branch
          %279 = sbr.rel (%p277) target = $region44
        $region43: #{tpu_custom_call.1} parent=39 // pred_region
          %p280 = scmp.lt.s32.totalorder %s27, 1
          %s281 = scalar_select %p280, %s27, 1
          %s282 = smul.addr %s281, 2
          %s283 = smul.addr %s282, 8
          %s284 = scalar_lea.vmem %s0, %s283
        $region44: #{tpu_custom_call.1} parent=39 // pred_fallthru
          _
        // Predicated region
        $region45: #{tpu_custom_call.1} parent=39 // pred_check
          %p285 = pneg %p80
        $region46: #{tpu_custom_call.1} parent=39 // pred_check_branch
          %287 = sbr.rel (%p285) target = $region48
        $region47: #{tpu_custom_call.1} parent=39 // pred_region
          %s288 = sand.u32 %s70, 1
          %s289 = scalar_lea.sflag [#allocation3], %s288
          %s290 = sand.u32 %s70, 1
          %s291 = smul.addr %s290, 16
          %s292 = scalar_lea.vmem [#allocation2], %s291
          %s293 = smul.u32 2, %s28
          %s295 = ssub.s32 256, 256
          %296 = vsyncadd %s289, %s295
          %s297 = smul.addr %s27, 2
          %s298 = sadd.s32 %s293, %s297
          %s299 = smul.addr %s298, 128
          %s300 = scalar_lea.hbm %s1, %s299
          %s302 = sshll.u32 %s292, 4
          %s303 = int_to_ptr.vmem [resolvable:$true] %s302
          %305 = dma.hbm_to_vmem [thread:$0]  %s300, 256, %s303, %s289
        $region48: #{tpu_custom_call.1} parent=39 // pred_fallthru
          _
      $region40: #{tpu_custom_call.1} parent=5 // pred_fallthru
        _
      %p306 = scmp.le.s32.totalorder 1, %s20
      %p307 = scmp.lt.s32.totalorder %s20, 3
      %p308 = pnand %p306, %p307
      %p309 = pneg %p308
      // Predicated region
      $region49: #{tpu_custom_call.1} parent=5 // pred_check
        _
      $region50: #{tpu_custom_call.1} parent=5 // pred_check_branch
        %311 = sbr.rel (%p308) target = $region52
      $region51: #{tpu_custom_call.1} parent=5 // pred_region
        %s312 = ssub.s32 %s20, 1
        %s313 = sand.u32 %s73, 1
        %s314 = scalar_lea.sflag [#allocation3], %s313
        %s315 = sand.u32 %s73, 1
        %s316 = smul.addr %s315, 16
        %s317 = scalar_lea.vmem [#allocation2], %s316
        // Predicated region
        $region53: #{tpu_custom_call.1} parent=51 // pred_check
          %p318 = pneg %p86
        $region54: #{tpu_custom_call.1} parent=51 // pred_check_branch
          %320 = sbr.rel (%p318) target = $region56
        $region55: #{tpu_custom_call.1} parent=51 // pred_region
          %321 = dma.done %s314, 256
        $region56: #{tpu_custom_call.1} parent=51 // pred_fallthru
          _
        %p322 = scmp.lt.s32.totalorder %s29, 1
        %s323 = scalar_select %p322, %s29, 1
        %s324 = smul.addr %s323, 2
        %s325 = smul.addr %s324, 8
        %s326 = scalar_lea.vmem %s0, %s325
        %p327 = pneg %p58
        %p328 = pneg %p55
        %s329 = sand.u32 %s73, 1
        %s330 = scalar_lea.sflag [#allocation3], %s329
        %s331 = sand.u32 %s73, 1
        %s332 = smul.addr %s331, 16
        %s333 = scalar_lea.vmem [#allocation2], %s332
        %p334 = pneg %p86
        %p335 = pneg %p83
        %p336 = pneg %p107
        %p337 = pneg %p104
        %p338 = pneg %p128
        %p339 = pneg %p125
        %p340 = pneg %p149
        %p341 = pneg %p146
        %p342 = pneg %p170
        %p343 = pneg %p167
        %p344 = pneg %p191
        %p345 = pneg %p188
        %p346 = pneg %p212
        %p347 = pneg %p209
        %p348 = pneg %p240
        %p349 = pneg %p237
        %s350 = sand.u32 %s227, 1
        %s351 = scalar_lea.sflag [#allocation4], %s350
        %s352 = sand.u32 %s227, 1
        %s353 = smul.addr %s352, 16
        %s354 = scalar_lea.vmem [#allocation5], %s353
        %p355 = scmp.lt.s32.totalorder %s29, 1
        %s356 = scalar_select %p355, %s29, 1
        %s357 = smul.addr %s356, 2
        %s358 = smul.addr %s357, 8
        %s359 = scalar_lea.vmem %s0, %s358
        %s360 = smul.u32 2, %s30
        %s361 = smul.u32 2, %s30
        %v363 = vld [vmem:[%s359] sm:$0xff]
        %v364 = vld [vmem:[%s359 + $0x8] sm:$0xff]
        %v365 = vld [vmem:[%s317] sm:$0xff]
        %v366 = vld [vmem:[%s317 + $0x8] sm:$0xff]
        %v367 = vld [vmem:[%s2] sm:$0xff]
        %v368 = vld [vmem:[%s3] sm:$0xff]
        %370 = vset.pattern.permute.xlu0 0
        %371 = vperm.xlu0 %370, %v368
        %v372 = vpop.permute.xlu0 %371
        %vm374 = vcmask 64512
        %v376 = vsel %vm374, %v367, 0
        %378 = vmatprep.subr.mxu0 %v364
        %379 = vmatpush1.msra.mxu0 %v363
        %380 = vmatprep.subr.mxu0 0.0
        %381 = vmatpush1.msra.mxu0 0.0
        %382 = vmatprep.subr.mxu0 0.0
        %383 = vmatpush1.msra.mxu0 0.0
        %384 = vmatprep.subr.mxu0 0.0
        %385 = vmatpush1.msra.mxu0 0.0
        %386 = vmatprep.subr.mxu0 0.0
        %387 = vmatpush1.msra.mxu0 0.0
        %388 = vmatprep.subr.mxu0 0.0
        %389 = vmatpush1.msra.mxu0 0.0
        %390 = vmatprep.subr.mxu0 0.0
        %391 = vmatpush1.msra.mxu0 0.0
        %392 = vmatprep.subr.mxu0 0.0
        %393 = vmatpush1.msra.mxu0 0.0
        %394 = vmatprep.subr.mxu0 0.0
        %395 = vmatpush1.msra.mxu0 0.0
        %396 = vmatprep.subr.mxu0 0.0
        %397 = vmatpush1.msra.mxu0 0.0
        %398 = vmatprep.subr.mxu0 0.0
        %399 = vmatpush1.msra.mxu0 0.0
        %400 = vmatprep.subr.mxu0 0.0
        %401 = vmatpush1.msra.mxu0 0.0
        %402 = vmatprep.subr.mxu0 0.0
        %403 = vmatpush1.msra.mxu0 0.0
        %404 = vmatprep.subr.mxu0 0.0
        %405 = vmatpush1.msra.mxu0 0.0
        %406 = vmatprep.subr.mxu0 0.0
        %407 = vmatpush1.msra.mxu0 0.0
        %408 = vmatprep.subr.mxu0 0.0
        %409 = vmatpush1.msra.mxu0 0.0
        %410 = vmatprep.subr.mxu0 0.0
        %411 = vmatpush1.msra.mxu0 0.0
        %412 = vmatprep.subr.mxu0 0.0
        %413 = vmatpush1.msra.mxu0 0.0
        %414 = vmatprep.subr.mxu0 0.0
        %415 = vmatpush1.msra.mxu0 0.0
        %416 = vmatprep.subr.mxu0 0.0
        %417 = vmatpush1.msra.mxu0 0.0
        %418 = vmatprep.subr.mxu0 0.0
        %419 = vmatpush1.msra.mxu0 0.0
        %420 = vmatprep.subr.mxu0 0.0
        %421 = vmatpush1.msra.mxu0 0.0
        %422 = vmatprep.subr.mxu0 0.0
        %423 = vmatpush1.msra.mxu0 0.0
        %424 = vmatprep.subr.mxu0 0.0
        %425 = vmatpush1.msra.mxu0 0.0
        %426 = vmatprep.subr.mxu0 0.0
        %427 = vmatpush1.msra.mxu0 0.0
        %428 = vmatprep.subr.mxu0 0.0
        %429 = vmatpush1.msra.mxu0 0.0
        %430 = vmatprep.subr.mxu0 0.0
        %431 = vmatpush1.msra.mxu0 0.0
        %432 = vmatprep.subr.mxu0 0.0
        %433 = vmatpush1.msra.mxu0 0.0
        %434 = vmatprep.subr.mxu0 0.0
        %435 = vmatpush1.msra.mxu0 0.0
        %436 = vmatprep.subr.mxu0 0.0
        %437 = vmatpush1.msra.mxu0 0.0
        %438 = vmatprep.subr.mxu0 0.0
        %439 = vmatpush1.msra.mxu0 0.0
        %440 = vmatprep.subr.mxu0 0.0
        %441 = vmatpush1.msra.mxu0 0.0
        %442 = vmatprep.mubr.f32.mxu0 0.0
        %443 = vmatmul.mubr.f32.gmra.mrb[0].mxu0 %v376
        %v444 = vpop.f32.mrb[0].mxu0
        %v445 = vadd.f32 %v372, %v444
        %v446 = vpop.f32.mrb[0].mxu0
        %v447 = vadd.f32 %v372, %v446
        %448 = vdwg.mxu0
        %v449 = vld [vmem:[%s4] sm:$0xf]
        %v450 = vld [vmem:[%s5] sm:$0xf]
        %452 = vset.pattern.permute.xlu0 0
        %453 = vperm.xlu0 %452, %v450
        %v454 = vpop.permute.xlu0 %453
        %v457 = vsel %vm374, %v449, 0
        %459 = vmatprep.subr.mxu0 %v366
        %460 = vmatpush1.msra.mxu0 %v365
        %461 = vmatprep.subr.mxu0 0.0
        %462 = vmatpush1.msra.mxu0 0.0
        %463 = vmatprep.subr.mxu0 0.0
        %464 = vmatpush1.msra.mxu0 0.0
        %465 = vmatprep.subr.mxu0 0.0
        %466 = vmatpush1.msra.mxu0 0.0
        %467 = vmatprep.subr.mxu0 0.0
        %468 = vmatpush1.msra.mxu0 0.0
        %469 = vmatprep.subr.mxu0 0.0
        %470 = vmatpush1.msra.mxu0 0.0
        %471 = vmatprep.subr.mxu0 0.0
        %472 = vmatpush1.msra.mxu0 0.0
        %473 = vmatprep.subr.mxu0 0.0
        %474 = vmatpush1.msra.mxu0 0.0
        %475 = vmatprep.subr.mxu0 0.0
        %476 = vmatpush1.msra.mxu0 0.0
        %477 = vmatprep.subr.mxu0 0.0
        %478 = vmatpush1.msra.mxu0 0.0
        %479 = vmatprep.subr.mxu0 0.0
        %480 = vmatpush1.msra.mxu0 0.0
        %481 = vmatprep.subr.mxu0 0.0
        %482 = vmatpush1.msra.mxu0 0.0
        %483 = vmatprep.subr.mxu0 0.0
        %484 = vmatpush1.msra.mxu0 0.0
        %485 = vmatprep.subr.mxu0 0.0
        %486 = vmatpush1.msra.mxu0 0.0
        %487 = vmatprep.subr.mxu0 0.0
        %488 = vmatpush1.msra.mxu0 0.0
        %489 = vmatprep.subr.mxu0 0.0
        %490 = vmatpush1.msra.mxu0 0.0
        %491 = vmatprep.subr.mxu0 0.0
        %492 = vmatpush1.msra.mxu0 0.0
        %493 = vmatprep.subr.mxu0 0.0
        %494 = vmatpush1.msra.mxu0 0.0
        %495 = vmatprep.subr.mxu0 0.0
        %496 = vmatpush1.msra.mxu0 0.0
        %497 = vmatprep.subr.mxu0 0.0
        %498 = vmatpush1.msra.mxu0 0.0
        %499 = vmatprep.subr.mxu0 0.0
        %500 = vmatpush1.msra.mxu0 0.0
        %501 = vmatprep.subr.mxu0 0.0
        %502 = vmatpush1.msra.mxu0 0.0
        %503 = vmatprep.subr.mxu0 0.0
        %504 = vmatpush1.msra.mxu0 0.0
        %505 = vmatprep.subr.mxu0 0.0
        %506 = vmatpush1.msra.mxu0 0.0
        %507 = vmatprep.subr.mxu0 0.0
        %508 = vmatpush1.msra.mxu0 0.0
        %509 = vmatprep.subr.mxu0 0.0
        %510 = vmatpush1.msra.mxu0 0.0
        %511 = vmatprep.subr.mxu0 0.0
        %512 = vmatpush1.msra.mxu0 0.0
        %513 = vmatprep.subr.mxu0 0.0
        %514 = vmatpush1.msra.mxu0 0.0
        %515 = vmatprep.subr.mxu0 0.0
        %516 = vmatpush1.msra.mxu0 0.0
        %517 = vmatprep.subr.mxu0 0.0
        %518 = vmatpush1.msra.mxu0 0.0
        %519 = vmatprep.subr.mxu0 0.0
        %520 = vmatpush1.msra.mxu0 0.0
        %521 = vmatprep.subr.mxu0 0.0
        %522 = vmatpush1.msra.mxu0 0.0
        %523 = vmatprep.mubr.f32.mxu0 0.0
        %524 = vmatmul.mubr.f32.gmra.mrb[0].mxu0 %v457
        %v525 = vpop.f32.mrb[0].mxu0
        %v526 = vadd.f32 %v454, %v525
        %v527 = vpop.f32.mrb[0].mxu0
        %v528 = vadd.f32 %v454, %v527
        %529 = vdwg.mxu0
        %530 = vxpose.xlu0.b32.start [1/16] %v526, 128
        %531 = vxpose.xlu0.b32.cont [2/16] 0.0, 128
        %532 = vxpose.xlu0.b32.cont [3/16] 0.0, 128
        %533 = vxpose.xlu0.b32.cont [4/16] 0.0, 128
        %534 = vxpose.xlu0.b32.cont [5/16] 0.0, 128
        %535 = vxpose.xlu0.b32.cont [6/16] 0.0, 128
        %536 = vxpose.xlu0.b32.cont [7/16] 0.0, 128
        %537 = vxpose.xlu0.b32.cont [8/16] 0.0, 128
        %538 = vxpose.xlu0.b32.cont [9/16] 0.0, 128
        %539 = vxpose.xlu0.b32.cont [10/16] 0.0, 128
        %540 = vxpose.xlu0.b32.cont [11/16] 0.0, 128
        %541 = vxpose.xlu0.b32.cont [12/16] 0.0, 128
        %542 = vxpose.xlu0.b32.cont [13/16] 0.0, 128
        %543 = vxpose.xlu0.b32.cont [14/16] 0.0, 128
        %544 = vxpose.xlu0.b32.cont [15/16] 0.0, 128
        %545 = vxpose.xlu0.b32.end [16/16] 0.0, 128
        %v546 = vpop.trf.xlu0
        %v547 = vpop.trf.xlu0
        %v548 = vpop.trf.xlu0
        %v549 = vpop.trf.xlu0
        %v550 = vpop.trf.xlu0
        %v551 = vpop.trf.xlu0
        %v552 = vpop.trf.xlu0
        %v553 = vpop.trf.xlu0
        %v554 = vpop.trf.xlu0
        %v555 = vpop.trf.xlu0
        %v556 = vpop.trf.xlu0
        %v557 = vpop.trf.xlu0
        %v558 = vpop.trf.xlu0
        %v559 = vpop.trf.xlu0
        %v560 = vpop.trf.xlu0
        %v561 = vpop.trf.xlu0
        %562 = vxpose.xlu0.b32.start [1/16] %v528, 128
        %563 = vxpose.xlu0.b32.cont [2/16] 0.0, 128
        %564 = vxpose.xlu0.b32.cont [3/16] 0.0, 128
        %565 = vxpose.xlu0.b32.cont [4/16] 0.0, 128
        %566 = vxpose.xlu0.b32.cont [5/16] 0.0, 128
        %567 = vxpose.xlu0.b32.cont [6/16] 0.0, 128
        %568 = vxpose.xlu0.b32.cont [7/16] 0.0, 128
        %569 = vxpose.xlu0.b32.cont [8/16] 0.0, 128
        %570 = vxpose.xlu0.b32.cont [9/16] 0.0, 128
        %571 = vxpose.xlu0.b32.cont [10/16] 0.0, 128
        %572 = vxpose.xlu0.b32.cont [11/16] 0.0, 128
        %573 = vxpose.xlu0.b32.cont [12/16] 0.0, 128
        %574 = vxpose.xlu0.b32.cont [13/16] 0.0, 128
        %575 = vxpose.xlu0.b32.cont [14/16] 0.0, 128
        %576 = vxpose.xlu0.b32.cont [15/16] 0.0, 128
        %577 = vxpose.xlu0.b32.end [16/16] 0.0, 128
        %v578 = vpop.trf.xlu0
        %v579 = vpop.trf.xlu0
        %v580 = vpop.trf.xlu0
        %v581 = vpop.trf.xlu0
        %v582 = vpop.trf.xlu0
        %v583 = vpop.trf.xlu0
        %v584 = vpop.trf.xlu0
        %v585 = vpop.trf.xlu0
        %v586 = vpop.trf.xlu0
        %v587 = vpop.trf.xlu0
        %v588 = vpop.trf.xlu0
        %v589 = vpop.trf.xlu0
        %v590 = vpop.trf.xlu0
        %v591 = vpop.trf.xlu0
        %v592 = vpop.trf.xlu0
        %v593 = vpop.trf.xlu0
        %v594 = vpack.c.bf16 %v547, %v546
        %v595 = vpack.c.bf16 %v549, %v548
        %v596 = vpack.c.bf16 %v551, %v550
        %v597 = vpack.c.bf16 %v553, %v552
        %v598 = vpack.c.bf16 %v555, %v554
        %v599 = vpack.c.bf16 %v557, %v556
        %v600 = vpack.c.bf16 %v559, %v558
        %v601 = vpack.c.bf16 %v561, %v560
        %v602 = vpack.c.bf16 %v579, %v578
        %v603 = vpack.c.bf16 %v581, %v580
        %v604 = vpack.c.bf16 %v583, %v582
        %v605 = vpack.c.bf16 %v585, %v584
        %v606 = vpack.c.bf16 %v587, %v586
        %v607 = vpack.c.bf16 %v589, %v588
        %v608 = vpack.c.bf16 %v591, %v590
        %v609 = vpack.c.bf16 %v593, %v592
        %v610 = vpack.c.bf16 %v445, %v445
        %v611 = vpack.c.bf16 %v447, %v447
        %v614 = vrot.slane %v610, 2
        %v615 = vrot.slane %v611, 2
        %vm616 = vcmask 31744
        %v618 = vsel %vm616, %v594, 0
        %v621 = vsel %vm616, %v595, 0
        %v624 = vsel %vm616, %v596, 0
        %v627 = vsel %vm616, %v597, 0
        %v630 = vsel %vm616, %v598, 0
        %v633 = vsel %vm616, %v599, 0
        %v636 = vsel %vm616, %v600, 0
        %v639 = vsel %vm616, %v601, 0
        %v642 = vsel %vm616, %v602, 0
        %v645 = vsel %vm616, %v603, 0
        %v648 = vsel %vm616, %v604, 0
        %v651 = vsel %vm616, %v605, 0
        %v654 = vsel %vm616, %v606, 0
        %v657 = vsel %vm616, %v607, 0
        %v660 = vsel %vm616, %v608, 0
        %v663 = vsel %vm616, %v609, 0
        %vm665 = vcmask 1041408
        %v667 = vsel %vm665, %v614, 0
        %v670 = vsel %vm665, %v615, 0
        %672 = vmatprep.subr.bf16.mxu0 %v670
        %673 = vmatpush1.bf16.msra.mxu0 %v667
        %674 = vmatprep.subr.bf16.mxu0 0
        %675 = vmatpush1.bf16.msra.mxu0 0
        %676 = vmatprep.subr.bf16.mxu0 0
        %677 = vmatpush1.bf16.msra.mxu0 0
        %678 = vmatprep.subr.bf16.mxu0 0
        %679 = vmatpush1.bf16.msra.mxu0 0
        %680 = vmatprep.subr.bf16.mxu0 0
        %681 = vmatpush1.bf16.msra.mxu0 0
        %682 = vmatprep.subr.bf16.mxu0 0
        %683 = vmatpush1.bf16.msra.mxu0 0
        %684 = vmatprep.subr.bf16.mxu0 0
        %685 = vmatpush1.bf16.msra.mxu0 0
        %686 = vmatprep.subr.bf16.mxu0 0
        %687 = vmatpush1.bf16.msra.mxu0 0
        %688 = vmatprep.subr.bf16.mxu0 0
        %689 = vmatpush1.bf16.msra.mxu0 0
        %690 = vmatprep.subr.bf16.mxu0 0
        %691 = vmatpush1.bf16.msra.mxu0 0
        %692 = vmatprep.subr.bf16.mxu0 0
        %693 = vmatpush1.bf16.msra.mxu0 0
        %694 = vmatprep.subr.bf16.mxu0 0
        %695 = vmatpush1.bf16.msra.mxu0 0
        %696 = vmatprep.subr.bf16.mxu0 0
        %697 = vmatpush1.bf16.msra.mxu0 0
        %698 = vmatprep.subr.bf16.mxu0 0
        %699 = vmatpush1.bf16.msra.mxu0 0
        %700 = vmatprep.subr.bf16.mxu0 0
        %701 = vmatpush1.bf16.msra.mxu0 0
        %702 = vmatprep.subr.bf16.mxu0 0
        %703 = vmatpush1.bf16.msra.mxu0 0
        %704 = vmatprep.mubr.bf16.mxu0 0
        %705 = vmatmul.mubr.bf16.gmra.mrb[0].mxu0 %v618
        %v706 = vpop.f32.mrb[0].mxu0
        %v707 = vadd.f32 0.0, %v706
        %v708 = vpop.f32.mrb[0].mxu0
        %v709 = vadd.f32 0.0, %v708
        %v710 = vpop.f32.mrb[0].mxu0
        %v711 = vadd.f32 0.0, %v710
        %v712 = vpop.f32.mrb[0].mxu0
        %v713 = vadd.f32 0.0, %v712
        %714 = vmatprep.mubr.bf16.mxu0 0
        %715 = vmatmul.mubr.bf16.gmra.mrb[0].mxu0 %v621
        %v716 = vpop.f32.mrb[0].mxu0
        %v717 = vadd.f32 0.0, %v716
        %v718 = vpop.f32.mrb[0].mxu0
        %v719 = vadd.f32 0.0, %v718
        %v720 = vpop.f32.mrb[0].mxu0
        %v721 = vadd.f32 0.0, %v720
        %v722 = vpop.f32.mrb[0].mxu0
        %v723 = vadd.f32 0.0, %v722
        %724 = vmatprep.mubr.bf16.mxu0 0
        %725 = vmatmul.mubr.bf16.gmra.mrb[0].mxu0 %v624
        %v726 = vpop.f32.mrb[0].mxu0
        %v727 = vadd.f32 0.0, %v726
        %v728 = vpop.f32.mrb[0].mxu0
        %v729 = vadd.f32 0.0, %v728
        %v730 = vpop.f32.mrb[0].mxu0
        %v731 = vadd.f32 0.0, %v730
        %v732 = vpop.f32.mrb[0].mxu0
        %v733 = vadd.f32 0.0, %v732
        %734 = vmatprep.mubr.bf16.mxu0 0
        %735 = vmatmul.mubr.bf16.gmra.mrb[0].mxu0 %v627
        %v736 = vpop.f32.mrb[0].mxu0
        %v737 = vadd.f32 0.0, %v736
        %v738 = vpop.f32.mrb[0].mxu0
        %v739 = vadd.f32 0.0, %v738
        %v740 = vpop.f32.mrb[0].mxu0
        %v741 = vadd.f32 0.0, %v740
        %v742 = vpop.f32.mrb[0].mxu0
        %v743 = vadd.f32 0.0, %v742
        %744 = vmatprep.mubr.bf16.mxu0 0
        %745 = vmatmul.mubr.bf16.gmra.mrb[0].mxu0 %v630
        %v746 = vpop.f32.mrb[0].mxu0
        %v747 = vadd.f32 0.0, %v746
        %v748 = vpop.f32.mrb[0].mxu0
        %v749 = vadd.f32 0.0, %v748
        %v750 = vpop.f32.mrb[0].mxu0
        %v751 = vadd.f32 0.0, %v750
        %v752 = vpop.f32.mrb[0].mxu0
        %v753 = vadd.f32 0.0, %v752
        %754 = vmatprep.mubr.bf16.mxu0 0
        %755 = vmatmul.mubr.bf16.gmra.mrb[0].mxu0 %v633
        %v756 = vpop.f32.mrb[0].mxu0
        %v757 = vadd.f32 0.0, %v756
        %v758 = vpop.f32.mrb[0].mxu0
        %v759 = vadd.f32 0.0, %v758
        %v760 = vpop.f32.mrb[0].mxu0
        %v761 = vadd.f32 0.0, %v760
        %v762 = vpop.f32.mrb[0].mxu0
        %v763 = vadd.f32 0.0, %v762
        %764 = vmatprep.mubr.bf16.mxu0 0
        %765 = vmatmul.mubr.bf16.gmra.mrb[0].mxu0 %v636
        %v766 = vpop.f32.mrb[0].mxu0
        %v767 = vadd.f32 0.0, %v766
        %v768 = vpop.f32.mrb[0].mxu0
        %v769 = vadd.f32 0.0, %v768
        %v770 = vpop.f32.mrb[0].mxu0
        %v771 = vadd.f32 0.0, %v770
        %v772 = vpop.f32.mrb[0].mxu0
        %v773 = vadd.f32 0.0, %v772
        %774 = vmatprep.mubr.bf16.mxu0 0
        %775 = vmatmul.mubr.bf16.gmra.mrb[0].mxu0 %v639
        %v776 = vpop.f32.mrb[0].mxu0
        %v777 = vadd.f32 0.0, %v776
        %v778 = vpop.f32.mrb[0].mxu0
        %v779 = vadd.f32 0.0, %v778
        %v780 = vpop.f32.mrb[0].mxu0
        %v781 = vadd.f32 0.0, %v780
        %v782 = vpop.f32.mrb[0].mxu0
        %v783 = vadd.f32 0.0, %v782
        %784 = vmatprep.mubr.bf16.mxu0 0
        %785 = vmatmul.mubr.bf16.gmra.mrb[0].mxu0 %v642
        %v786 = vpop.f32.mrb[0].mxu0
        %v787 = vadd.f32 0.0, %v786
        %v788 = vpop.f32.mrb[0].mxu0
        %v789 = vadd.f32 0.0, %v788
        %v790 = vpop.f32.mrb[0].mxu0
        %v791 = vadd.f32 0.0, %v790
        %v792 = vpop.f32.mrb[0].mxu0
        %v793 = vadd.f32 0.0, %v792
        %794 = vmatprep.mubr.bf16.mxu0 0
        %795 = vmatmul.mubr.bf16.gmra.mrb[0].mxu0 %v645
        %v796 = vpop.f32.mrb[0].mxu0
        %v797 = vadd.f32 0.0, %v796
        %v798 = vpop.f32.mrb[0].mxu0
        %v799 = vadd.f32 0.0, %v798
        %v800 = vpop.f32.mrb[0].mxu0
        %v801 = vadd.f32 0.0, %v800
        %v802 = vpop.f32.mrb[0].mxu0
        %v803 = vadd.f32 0.0, %v802
        %804 = vmatprep.mubr.bf16.mxu0 0
        %805 = vmatmul.mubr.bf16.gmra.mrb[0].mxu0 %v648
        %v806 = vpop.f32.mrb[0].mxu0
        %v807 = vadd.f32 0.0, %v806
        %v808 = vpop.f32.mrb[0].mxu0
        %v809 = vadd.f32 0.0, %v808
        %v810 = vpop.f32.mrb[0].mxu0
        %v811 = vadd.f32 0.0, %v810
        %v812 = vpop.f32.mrb[0].mxu0
        %v813 = vadd.f32 0.0, %v812
        %814 = vmatprep.mubr.bf16.mxu0 0
        %815 = vmatmul.mubr.bf16.gmra.mrb[0].mxu0 %v651
        %v816 = vpop.f32.mrb[0].mxu0
        %v817 = vadd.f32 0.0, %v816
        %v818 = vpop.f32.mrb[0].mxu0
        %v819 = vadd.f32 0.0, %v818
        %v820 = vpop.f32.mrb[0].mxu0
        %v821 = vadd.f32 0.0, %v820
        %v822 = vpop.f32.mrb[0].mxu0
        %v823 = vadd.f32 0.0, %v822
        %824 = vmatprep.mubr.bf16.mxu0 0
        %825 = vmatmul.mubr.bf16.gmra.mrb[0].mxu0 %v654
        %v826 = vpop.f32.mrb[0].mxu0
        %v827 = vadd.f32 0.0, %v826
        %v828 = vpop.f32.mrb[0].mxu0
        %v829 = vadd.f32 0.0, %v828
        %v830 = vpop.f32.mrb[0].mxu0
        %v831 = vadd.f32 0.0, %v830
        %v832 = vpop.f32.mrb[0].mxu0
        %v833 = vadd.f32 0.0, %v832
        %834 = vmatprep.mubr.bf16.mxu0 0
        %835 = vmatmul.mubr.bf16.gmra.mrb[0].mxu0 %v657
        %v836 = vpop.f32.mrb[0].mxu0
        %v837 = vadd.f32 0.0, %v836
        %v838 = vpop.f32.mrb[0].mxu0
        %v839 = vadd.f32 0.0, %v838
        %v840 = vpop.f32.mrb[0].mxu0
        %v841 = vadd.f32 0.0, %v840
        %v842 = vpop.f32.mrb[0].mxu0
        %v843 = vadd.f32 0.0, %v842
        %844 = vmatprep.mubr.bf16.mxu0 0
        %845 = vmatmul.mubr.bf16.gmra.mrb[0].mxu0 %v660
        %v846 = vpop.f32.mrb[0].mxu0
        %v847 = vadd.f32 0.0, %v846
        %v848 = vpop.f32.mrb[0].mxu0
        %v849 = vadd.f32 0.0, %v848
        %v850 = vpop.f32.mrb[0].mxu0
        %v851 = vadd.f32 0.0, %v850
        %v852 = vpop.f32.mrb[0].mxu0
        %v853 = vadd.f32 0.0, %v852
        %854 = vmatprep.mubr.bf16.mxu0 0
        %855 = vmatmul.mubr.bf16.gmra.mrb[0].mxu0 %v663
        %v856 = vpop.f32.mrb[0].mxu0
        %v857 = vadd.f32 0.0, %v856
        %v858 = vpop.f32.mrb[0].mxu0
        %v859 = vadd.f32 0.0, %v858
        %v860 = vpop.f32.mrb[0].mxu0
        %v861 = vadd.f32 0.0, %v860
        %v862 = vpop.f32.mrb[0].mxu0
        %v863 = vadd.f32 0.0, %v862
        %864 = vdwg.mxu0
        %v865 = vmax.f32 %v707, %v709
        %866 = vmax.xlane.f32.xlu0 %v865
        %v867 = vpop.xlane.xlu0 %866
        %v868 = vmax.f32 %v711, %v713
        %869 = vmax.xlane.f32.xlu0 %v868
        %v870 = vpop.xlane.xlu0 %869
        %v871 = vmax.f32 %v717, %v719
        %872 = vmax.xlane.f32.xlu0 %v871
        %v873 = vpop.xlane.xlu0 %872
        %v874 = vmax.f32 %v721, %v723
        %875 = vmax.xlane.f32.xlu0 %v874
        %v876 = vpop.xlane.xlu0 %875
        %v877 = vmax.f32 %v727, %v729
        %878 = vmax.xlane.f32.xlu0 %v877
        %v879 = vpop.xlane.xlu0 %878
        %v880 = vmax.f32 %v731, %v733
        %881 = vmax.xlane.f32.xlu0 %v880
        %v882 = vpop.xlane.xlu0 %881
        %v883 = vmax.f32 %v737, %v739
        %884 = vmax.xlane.f32.xlu0 %v883
        %v885 = vpop.xlane.xlu0 %884
        %v886 = vmax.f32 %v741, %v743
        %887 = vmax.xlane.f32.xlu0 %v886
        %v888 = vpop.xlane.xlu0 %887
        %v889 = vmax.f32 %v747, %v749
        %890 = vmax.xlane.f32.xlu0 %v889
        %v891 = vpop.xlane.xlu0 %890
        %v892 = vmax.f32 %v751, %v753
        %893 = vmax.xlane.f32.xlu0 %v892
        %v894 = vpop.xlane.xlu0 %893
        %v895 = vmax.f32 %v757, %v759
        %896 = vmax.xlane.f32.xlu0 %v895
        %v897 = vpop.xlane.xlu0 %896
        %v898 = vmax.f32 %v761, %v763
        %899 = vmax.xlane.f32.xlu0 %v898
        %v900 = vpop.xlane.xlu0 %899
        %v901 = vmax.f32 %v767, %v769
        %902 = vmax.xlane.f32.xlu0 %v901
        %v903 = vpop.xlane.xlu0 %902
        %v904 = vmax.f32 %v771, %v773
        %905 = vmax.xlane.f32.xlu0 %v904
        %v906 = vpop.xlane.xlu0 %905
        %v907 = vmax.f32 %v777, %v779
        %908 = vmax.xlane.f32.xlu0 %v907
        %v909 = vpop.xlane.xlu0 %908
        %v910 = vmax.f32 %v781, %v783
        %911 = vmax.xlane.f32.xlu0 %v910
        %v912 = vpop.xlane.xlu0 %911
        %v913 = vmax.f32 %v787, %v789
        %914 = vmax.xlane.f32.xlu0 %v913
        %v915 = vpop.xlane.xlu0 %914
        %v916 = vmax.f32 %v791, %v793
        %917 = vmax.xlane.f32.xlu0 %v916
        %v918 = vpop.xlane.xlu0 %917
        %v919 = vmax.f32 %v797, %v799
        %920 = vmax.xlane.f32.xlu0 %v919
        %v921 = vpop.xlane.xlu0 %920
        %v922 = vmax.f32 %v801, %v803
        %923 = vmax.xlane.f32.xlu0 %v922
        %v924 = vpop.xlane.xlu0 %923
        %v925 = vmax.f32 %v807, %v809
        %926 = vmax.xlane.f32.xlu0 %v925
        %v927 = vpop.xlane.xlu0 %926
        %v928 = vmax.f32 %v811, %v813
        %929 = vmax.xlane.f32.xlu0 %v928
        %v930 = vpop.xlane.xlu0 %929
        %v931 = vmax.f32 %v817, %v819
        %932 = vmax.xlane.f32.xlu0 %v931
        %v933 = vpop.xlane.xlu0 %932
        %v934 = vmax.f32 %v821, %v823
        %935 = vmax.xlane.f32.xlu0 %v934
        %v936 = vpop.xlane.xlu0 %935
        %v937 = vmax.f32 %v827, %v829
        %938 = vmax.xlane.f32.xlu0 %v937
        %v939 = vpop.xlane.xlu0 %938
        %v940 = vmax.f32 %v831, %v833
        %941 = vmax.xlane.f32.xlu0 %v940
        %v942 = vpop.xlane.xlu0 %941
        %v943 = vmax.f32 %v837, %v839
        %944 = vmax.xlane.f32.xlu0 %v943
        %v945 = vpop.xlane.xlu0 %944
        %v946 = vmax.f32 %v841, %v843
        %947 = vmax.xlane.f32.xlu0 %v946
        %v948 = vpop.xlane.xlu0 %947
        %v949 = vmax.f32 %v847, %v849
        %950 = vmax.xlane.f32.xlu0 %v949
        %v951 = vpop.xlane.xlu0 %950
        %v952 = vmax.f32 %v851, %v853
        %953 = vmax.xlane.f32.xlu0 %v952
        %v954 = vpop.xlane.xlu0 %953
        %v955 = vmax.f32 %v857, %v859
        %956 = vmax.xlane.f32.xlu0 %v955
        %v957 = vpop.xlane.xlu0 %956
        %v958 = vmax.f32 %v861, %v863
        %959 = vmax.xlane.f32.xlu0 %v958
        %v960 = vpop.xlane.xlu0 %959
        %v961 = vsub.f32 %v707, %v867
        %v962 = vsub.f32 %v709, %v867
        %v963 = vsub.f32 %v711, %v870
        %v964 = vsub.f32 %v713, %v870
        %v965 = vsub.f32 %v717, %v873
        %v966 = vsub.f32 %v719, %v873
        %v967 = vsub.f32 %v721, %v876
        %v968 = vsub.f32 %v723, %v876
        %v969 = vsub.f32 %v727, %v879
        %v970 = vsub.f32 %v729, %v879
        %v971 = vsub.f32 %v731, %v882
        %v972 = vsub.f32 %v733, %v882
        %v973 = vsub.f32 %v737, %v885
        %v974 = vsub.f32 %v739, %v885
        %v975 = vsub.f32 %v741, %v888
        %v976 = vsub.f32 %v743, %v888
        %v977 = vsub.f32 %v747, %v891
        %v978 = vsub.f32 %v749, %v891
        %v979 = vsub.f32 %v751, %v894
        %v980 = vsub.f32 %v753, %v894
        %v981 = vsub.f32 %v757, %v897
        %v982 = vsub.f32 %v759, %v897
        %v983 = vsub.f32 %v761, %v900
        %v984 = vsub.f32 %v763, %v900
        %v985 = vsub.f32 %v767, %v903
        %v986 = vsub.f32 %v769, %v903
        %v987 = vsub.f32 %v771, %v906
        %v988 = vsub.f32 %v773, %v906
        %v989 = vsub.f32 %v777, %v909
        %v990 = vsub.f32 %v779, %v909
        %v991 = vsub.f32 %v781, %v912
        %v992 = vsub.f32 %v783, %v912
        %v993 = vsub.f32 %v787, %v915
        %v994 = vsub.f32 %v789, %v915
        %v995 = vsub.f32 %v791, %v918
        %v996 = vsub.f32 %v793, %v918
        %v997 = vsub.f32 %v797, %v921
        %v998 = vsub.f32 %v799, %v921
        %v999 = vsub.f32 %v801, %v924
        %v1000 = vsub.f32 %v803, %v924
        %v1001 = vsub.f32 %v807, %v927
        %v1002 = vsub.f32 %v809, %v927
        %v1003 = vsub.f32 %v811, %v930
        %v1004 = vsub.f32 %v813, %v930
        %v1005 = vsub.f32 %v817, %v933
        %v1006 = vsub.f32 %v819, %v933
        %v1007 = vsub.f32 %v821, %v936
        %v1008 = vsub.f32 %v823, %v936
        %v1009 = vsub.f32 %v827, %v939
        %v1010 = vsub.f32 %v829, %v939
        %v1011 = vsub.f32 %v831, %v942
        %v1012 = vsub.f32 %v833, %v942
        %v1013 = vsub.f32 %v837, %v945
        %v1014 = vsub.f32 %v839, %v945
        %v1015 = vsub.f32 %v841, %v948
        %v1016 = vsub.f32 %v843, %v948
        %v1017 = vsub.f32 %v847, %v951
        %v1018 = vsub.f32 %v849, %v951
        %v1019 = vsub.f32 %v851, %v954
        %v1020 = vsub.f32 %v853, %v954
        %v1021 = vsub.f32 %v857, %v957
        %v1022 = vsub.f32 %v859, %v957
        %v1023 = vsub.f32 %v861, %v960
        %v1024 = vsub.f32 %v863, %v960
        %v1025 = vmul.f32 %v961, 1.442695
        %v1026 = vpow.pop %v1025
        %v1027 = vmul.f32 %v962, 1.442695
        %v1028 = vpow.pop %v1027
        %v1029 = vmul.f32 %v963, 1.442695
        %v1030 = vpow.pop %v1029
        %v1031 = vmul.f32 %v964, 1.442695
        %v1032 = vpow.pop %v1031
        %v1033 = vmul.f32 %v965, 1.442695
        %v1034 = vpow.pop %v1033
        %v1035 = vmul.f32 %v966, 1.442695
        %v1036 = vpow.pop %v1035
        %v1037 = vmul.f32 %v967, 1.442695
        %v1038 = vpow.pop %v1037
        %v1039 = vmul.f32 %v968, 1.442695
        %v1040 = vpow.pop %v1039
        %v1041 = vmul.f32 %v969, 1.442695
        %v1042 = vpow.pop %v1041
        %v1043 = vmul.f32 %v970, 1.442695
        %v1044 = vpow.pop %v1043
        %v1045 = vmul.f32 %v971, 1.442695
        %v1046 = vpow.pop %v1045
        %v1047 = vmul.f32 %v972, 1.442695
        %v1048 = vpow.pop %v1047
        %v1049 = vmul.f32 %v973, 1.442695
        %v1050 = vpow.pop %v1049
        %v1051 = vmul.f32 %v974, 1.442695
        %v1052 = vpow.pop %v1051
        %v1053 = vmul.f32 %v975, 1.442695
        %v1054 = vpow.pop %v1053
        %v1055 = vmul.f32 %v976, 1.442695
        %v1056 = vpow.pop %v1055
        %v1057 = vmul.f32 %v977, 1.442695
        %v1058 = vpow.pop %v1057
        %v1059 = vmul.f32 %v978, 1.442695
        %v1060 = vpow.pop %v1059
        %v1061 = vmul.f32 %v979, 1.442695
        %v1062 = vpow.pop %v1061
        %v1063 = vmul.f32 %v980, 1.442695
        %v1064 = vpow.pop %v1063
        %v1065 = vmul.f32 %v981, 1.442695
        %v1066 = vpow.pop %v1065
        %v1067 = vmul.f32 %v982, 1.442695
        %v1068 = vpow.pop %v1067
        %v1069 = vmul.f32 %v983, 1.442695
        %v1070 = vpow.pop %v1069
        %v1071 = vmul.f32 %v984, 1.442695
        %v1072 = vpow.pop %v1071
        %v1073 = vmul.f32 %v985, 1.442695
        %v1074 = vpow.pop %v1073
        %v1075 = vmul.f32 %v986, 1.442695
        %v1076 = vpow.pop %v1075
        %v1077 = vmul.f32 %v987, 1.442695
        %v1078 = vpow.pop %v1077
        %v1079 = vmul.f32 %v988, 1.442695
        %v1080 = vpow.pop %v1079
        %v1081 = vmul.f32 %v989, 1.442695
        %v1082 = vpow.pop %v1081
        %v1083 = vmul.f32 %v990, 1.442695
        %v1084 = vpow.pop %v1083
        %v1085 = vmul.f32 %v991, 1.442695
        %v1086 = vpow.pop %v1085
        %v1087 = vmul.f32 %v992, 1.442695
        %v1088 = vpow.pop %v1087
        %v1089 = vmul.f32 %v993, 1.442695
        %v1090 = vpow.pop %v1089
        %v1091 = vmul.f32 %v994, 1.442695
        %v1092 = vpow.pop %v1091
        %v1093 = vmul.f32 %v995, 1.442695
        %v1094 = vpow.pop %v1093
        %v1095 = vmul.f32 %v996, 1.442695
        %v1096 = vpow.pop %v1095
        %v1097 = vmul.f32 %v997, 1.442695
        %v1098 = vpow.pop %v1097
        %v1099 = vmul.f32 %v998, 1.442695
        %v1100 = vpow.pop %v1099
        %v1101 = vmul.f32 %v999, 1.442695
        %v1102 = vpow.pop %v1101
        %v1103 = vmul.f32 %v1000, 1.442695
        %v1104 = vpow.pop %v1103
        %v1105 = vmul.f32 %v1001, 1.442695
        %v1106 = vpow.pop %v1105
        %v1107 = vmul.f32 %v1002, 1.442695
        %v1108 = vpow.pop %v1107
        %v1109 = vmul.f32 %v1003, 1.442695
        %v1110 = vpow.pop %v1109
        %v1111 = vmul.f32 %v1004, 1.442695
        %v1112 = vpow.pop %v1111
        %v1113 = vmul.f32 %v1005, 1.442695
        %v1114 = vpow.pop %v1113
        %v1115 = vmul.f32 %v1006, 1.442695
        %v1116 = vpow.pop %v1115
        %v1117 = vmul.f32 %v1007, 1.442695
        %v1118 = vpow.pop %v1117
        %v1119 = vmul.f32 %v1008, 1.442695
        %v1120 = vpow.pop %v1119
        %v1121 = vmul.f32 %v1009, 1.442695
        %v1122 = vpow.pop %v1121
        %v1123 = vmul.f32 %v1010, 1.442695
        %v1124 = vpow.pop %v1123
        %v1125 = vmul.f32 %v1011, 1.442695
        %v1126 = vpow.pop %v1125
        %v1127 = vmul.f32 %v1012, 1.442695
        %v1128 = vpow.pop %v1127
        %v1129 = vmul.f32 %v1013, 1.442695
        %v1130 = vpow.pop %v1129
        %v1131 = vmul.f32 %v1014, 1.442695
        %v1132 = vpow.pop %v1131
        %v1133 = vmul.f32 %v1015, 1.442695
        %v1134 = vpow.pop %v1133
        %v1135 = vmul.f32 %v1016, 1.442695
        %v1136 = vpow.pop %v1135
        %v1137 = vmul.f32 %v1017, 1.442695
        %v1138 = vpow.pop %v1137
        %v1139 = vmul.f32 %v1018, 1.442695
        %v1140 = vpow.pop %v1139
        %v1141 = vmul.f32 %v1019, 1.442695
        %v1142 = vpow.pop %v1141
        %v1143 = vmul.f32 %v1020, 1.442695
        %v1144 = vpow.pop %v1143
        %v1145 = vmul.f32 %v1021, 1.442695
        %v1146 = vpow.pop %v1145
        %v1147 = vmul.f32 %v1022, 1.442695
        %v1148 = vpow.pop %v1147
        %v1149 = vmul.f32 %v1023, 1.442695
        %v1150 = vpow.pop %v1149
        %v1151 = vmul.f32 %v1024, 1.442695
        %v1152 = vpow.pop %v1151
        %v1153 = vadd.f32 %v1026, %v1028
        %1154 = vadd.xlane.f32.xlu0 %v1153
        %v1155 = vpop.xlane.xlu0 %1154
        %v1156 = vadd.f32 %v1030, %v1032
        %1157 = vadd.xlane.f32.xlu0 %v1156
        %v1158 = vpop.xlane.xlu0 %1157
        %v1159 = vadd.f32 %v1034, %v1036
        %1160 = vadd.xlane.f32.xlu0 %v1159
        %v1161 = vpop.xlane.xlu0 %1160
        %v1162 = vadd.f32 %v1038, %v1040
        %1163 = vadd.xlane.f32.xlu0 %v1162
        %v1164 = vpop.xlane.xlu0 %1163
        %v1165 = vadd.f32 %v1042, %v1044
        %1166 = vadd.xlane.f32.xlu0 %v1165
        %v1167 = vpop.xlane.xlu0 %1166
        %v1168 = vadd.f32 %v1046, %v1048
        %1169 = vadd.xlane.f32.xlu0 %v1168
        %v1170 = vpop.xlane.xlu0 %1169
        %v1171 = vadd.f32 %v1050, %v1052
        %1172 = vadd.xlane.f32.xlu0 %v1171
        %v1173 = vpop.xlane.xlu0 %1172
        %v1174 = vadd.f32 %v1054, %v1056
        %1175 = vadd.xlane.f32.xlu0 %v1174
        %v1176 = vpop.xlane.xlu0 %1175
        %v1177 = vadd.f32 %v1058, %v1060
        %1178 = vadd.xlane.f32.xlu0 %v1177
        %v1179 = vpop.xlane.xlu0 %1178
        %v1180 = vadd.f32 %v1062, %v1064
        %1181 = vadd.xlane.f32.xlu0 %v1180
        %v1182 = vpop.xlane.xlu0 %1181
        %v1183 = vadd.f32 %v1066, %v1068
        %1184 = vadd.xlane.f32.xlu0 %v1183
        %v1185 = vpop.xlane.xlu0 %1184
        %v1186 = vadd.f32 %v1070, %v1072
        %1187 = vadd.xlane.f32.xlu0 %v1186
        %v1188 = vpop.xlane.xlu0 %1187
        %v1189 = vadd.f32 %v1074, %v1076
        %1190 = vadd.xlane.f32.xlu0 %v1189
        %v1191 = vpop.xlane.xlu0 %1190
        %v1192 = vadd.f32 %v1078, %v1080
        %1193 = vadd.xlane.f32.xlu0 %v1192
        %v1194 = vpop.xlane.xlu0 %1193
        %v1195 = vadd.f32 %v1082, %v1084
        %1196 = vadd.xlane.f32.xlu0 %v1195
        %v1197 = vpop.xlane.xlu0 %1196
        %v1198 = vadd.f32 %v1086, %v1088
        %1199 = vadd.xlane.f32.xlu0 %v1198
        %v1200 = vpop.xlane.xlu0 %1199
        %v1201 = vadd.f32 %v1090, %v1092
        %1202 = vadd.xlane.f32.xlu0 %v1201
        %v1203 = vpop.xlane.xlu0 %1202
        %v1204 = vadd.f32 %v1094, %v1096
        %1205 = vadd.xlane.f32.xlu0 %v1204
        %v1206 = vpop.xlane.xlu0 %1205
        %v1207 = vadd.f32 %v1098, %v1100
        %1208 = vadd.xlane.f32.xlu0 %v1207
        %v1209 = vpop.xlane.xlu0 %1208
        %v1210 = vadd.f32 %v1102, %v1104
        %1211 = vadd.xlane.f32.xlu0 %v1210
        %v1212 = vpop.xlane.xlu0 %1211
        %v1213 = vadd.f32 %v1106, %v1108
        %1214 = vadd.xlane.f32.xlu0 %v1213
        %v1215 = vpop.xlane.xlu0 %1214
        %v1216 = vadd.f32 %v1110, %v1112
        %1217 = vadd.xlane.f32.xlu0 %v1216
        %v1218 = vpop.xlane.xlu0 %1217
        %v1219 = vadd.f32 %v1114, %v1116
        %1220 = vadd.xlane.f32.xlu0 %v1219
        %v1221 = vpop.xlane.xlu0 %1220
        %v1222 = vadd.f32 %v1118, %v1120
        %1223 = vadd.xlane.f32.xlu0 %v1222
        %v1224 = vpop.xlane.xlu0 %1223
        %v1225 = vadd.f32 %v1122, %v1124
        %1226 = vadd.xlane.f32.xlu0 %v1225
        %v1227 = vpop.xlane.xlu0 %1226
        %v1228 = vadd.f32 %v1126, %v1128
        %1229 = vadd.xlane.f32.xlu0 %v1228
        %v1230 = vpop.xlane.xlu0 %1229
        %v1231 = vadd.f32 %v1130, %v1132
        %1232 = vadd.xlane.f32.xlu0 %v1231
        %v1233 = vpop.xlane.xlu0 %1232
        %v1234 = vadd.f32 %v1134, %v1136
        %1235 = vadd.xlane.f32.xlu0 %v1234
        %v1236 = vpop.xlane.xlu0 %1235
        %v1237 = vadd.f32 %v1138, %v1140
        %1238 = vadd.xlane.f32.xlu0 %v1237
        %v1239 = vpop.xlane.xlu0 %1238
        %v1240 = vadd.f32 %v1142, %v1144
        %1241 = vadd.xlane.f32.xlu0 %v1240
        %v1242 = vpop.xlane.xlu0 %1241
        %v1243 = vadd.f32 %v1146, %v1148
        %1244 = vadd.xlane.f32.xlu0 %v1243
        %v1245 = vpop.xlane.xlu0 %1244
        %v1246 = vadd.f32 %v1150, %v1152
        %1247 = vadd.xlane.f32.xlu0 %v1246
        %v1248 = vpop.xlane.xlu0 %1247
        %v1249 = vrcp.pop %v1155
        %v1250 = vrcp.pop %v1158
        %v1251 = vrcp.pop %v1161
        %v1252 = vrcp.pop %v1164
        %v1253 = vrcp.pop %v1167
        %v1254 = vrcp.pop %v1170
        %v1255 = vrcp.pop %v1173
        %v1256 = vrcp.pop %v1176
        %v1257 = vrcp.pop %v1179
        %v1258 = vrcp.pop %v1182
        %v1259 = vrcp.pop %v1185
        %v1260 = vrcp.pop %v1188
        %v1261 = vrcp.pop %v1191
        %v1262 = vrcp.pop %v1194
        %v1263 = vrcp.pop %v1197
        %v1264 = vrcp.pop %v1200
        %v1265 = vrcp.pop %v1203
        %v1266 = vrcp.pop %v1206
        %v1267 = vrcp.pop %v1209
        %v1268 = vrcp.pop %v1212
        %v1269 = vrcp.pop %v1215
        %v1270 = vrcp.pop %v1218
        %v1271 = vrcp.pop %v1221
        %v1272 = vrcp.pop %v1224
        %v1273 = vrcp.pop %v1227
        %v1274 = vrcp.pop %v1230
        %v1275 = vrcp.pop %v1233
        %v1276 = vrcp.pop %v1236
        %v1277 = vrcp.pop %v1239
        %v1278 = vrcp.pop %v1242
        %v1279 = vrcp.pop %v1245
        %v1280 = vrcp.pop %v1248
        %v1281 = vmul.f32 %v1026, %v1249
        %v1282 = vmul.f32 %v1028, %v1249
        %v1283 = vmul.f32 %v1030, %v1250
        %v1284 = vmul.f32 %v1032, %v1250
        %v1285 = vmul.f32 %v1034, %v1251
        %v1286 = vmul.f32 %v1036, %v1251
        %v1287 = vmul.f32 %v1038, %v1252
        %v1288 = vmul.f32 %v1040, %v1252
        %v1289 = vmul.f32 %v1042, %v1253
        %v1290 = vmul.f32 %v1044, %v1253
        %v1291 = vmul.f32 %v1046, %v1254
        %v1292 = vmul.f32 %v1048, %v1254
        %v1293 = vmul.f32 %v1050, %v1255
        %v1294 = vmul.f32 %v1052, %v1255
        %v1295 = vmul.f32 %v1054, %v1256
        %v1296 = vmul.f32 %v1056, %v1256
        %v1297 = vmul.f32 %v1058, %v1257
        %v1298 = vmul.f32 %v1060, %v1257
        %v1299 = vmul.f32 %v1062, %v1258
        %v1300 = vmul.f32 %v1064, %v1258
        %v1301 = vmul.f32 %v1066, %v1259
        %v1302 = vmul.f32 %v1068, %v1259
        %v1303 = vmul.f32 %v1070, %v1260
        %v1304 = vmul.f32 %v1072, %v1260
        %v1305 = vmul.f32 %v1074, %v1261
        %v1306 = vmul.f32 %v1076, %v1261
        %v1307 = vmul.f32 %v1078, %v1262
        %v1308 = vmul.f32 %v1080, %v1262
        %v1309 = vmul.f32 %v1082, %v1263
        %v1310 = vmul.f32 %v1084, %v1263
        %v1311 = vmul.f32 %v1086, %v1264
        %v1312 = vmul.f32 %v1088, %v1264
        %v1313 = vmul.f32 %v1090, %v1265
        %v1314 = vmul.f32 %v1092, %v1265
        %v1315 = vmul.f32 %v1094, %v1266
        %v1316 = vmul.f32 %v1096, %v1266
        %v1317 = vmul.f32 %v1098, %v1267
        %v1318 = vmul.f32 %v1100, %v1267
        %v1319 = vmul.f32 %v1102, %v1268
        %v1320 = vmul.f32 %v1104, %v1268
        %v1321 = vmul.f32 %v1106, %v1269
        %v1322 = vmul.f32 %v1108, %v1269
        %v1323 = vmul.f32 %v1110, %v1270
        %v1324 = vmul.f32 %v1112, %v1270
        %v1325 = vmul.f32 %v1114, %v1271
        %v1326 = vmul.f32 %v1116, %v1271
        %v1327 = vmul.f32 %v1118, %v1272
        %v1328 = vmul.f32 %v1120, %v1272
        %v1329 = vmul.f32 %v1122, %v1273
        %v1330 = vmul.f32 %v1124, %v1273
        %v1331 = vmul.f32 %v1126, %v1274
        %v1332 = vmul.f32 %v1128, %v1274
        %v1333 = vmul.f32 %v1130, %v1275
        %v1334 = vmul.f32 %v1132, %v1275
        %v1335 = vmul.f32 %v1134, %v1276
        %v1336 = vmul.f32 %v1136, %v1276
        %v1337 = vmul.f32 %v1138, %v1277
        %v1338 = vmul.f32 %v1140, %v1277
        %v1339 = vmul.f32 %v1142, %v1278
        %v1340 = vmul.f32 %v1144, %v1278
        %v1341 = vmul.f32 %v1146, %v1279
        %v1342 = vmul.f32 %v1148, %v1279
        %v1343 = vmul.f32 %v1150, %v1280
        %v1344 = vmul.f32 %v1152, %v1280
        %v1345 = vpack.c.bf16 %v1283, %v1281
        %v1346 = vpack.c.bf16 %v1284, %v1282
        %v1347 = vpack.c.bf16 %v1287, %v1285
        %v1348 = vpack.c.bf16 %v1288, %v1286
        %v1349 = vpack.c.bf16 %v1291, %v1289
        %v1350 = vpack.c.bf16 %v1292, %v1290
        %v1351 = vpack.c.bf16 %v1295, %v1293
        %v1352 = vpack.c.bf16 %v1296, %v1294
        %v1353 = vpack.c.bf16 %v1299, %v1297
        %v1354 = vpack.c.bf16 %v1300, %v1298
        %v1355 = vpack.c.bf16 %v1303, %v1301
        %v1356 = vpack.c.bf16 %v1304, %v1302
        %v1357 = vpack.c.bf16 %v1307, %v1305
        %v1358 = vpack.c.bf16 %v1308, %v1306
        %v1359 = vpack.c.bf16 %v1311, %v1309
        %v1360 = vpack.c.bf16 %v1312, %v1310
        %v1361 = vpack.c.bf16 %v1315, %v1313
        %v1362 = vpack.c.bf16 %v1316, %v1314
        %v1363 = vpack.c.bf16 %v1319, %v1317
        %v1364 = vpack.c.bf16 %v1320, %v1318
        %v1365 = vpack.c.bf16 %v1323, %v1321
        %v1366 = vpack.c.bf16 %v1324, %v1322
        %v1367 = vpack.c.bf16 %v1327, %v1325
        %v1368 = vpack.c.bf16 %v1328, %v1326
        %v1369 = vpack.c.bf16 %v1331, %v1329
        %v1370 = vpack.c.bf16 %v1332, %v1330
        %v1371 = vpack.c.bf16 %v1335, %v1333
        %v1372 = vpack.c.bf16 %v1336, %v1334
        %v1373 = vpack.c.bf16 %v1339, %v1337
        %v1374 = vpack.c.bf16 %v1340, %v1338
        %v1375 = vpack.c.bf16 %v1343, %v1341
        %v1376 = vpack.c.bf16 %v1344, %v1342
        %1377 = vmatprep.subr.bf16.mxu0 %v1346
        %1378 = vmatpush1.bf16.xpose.msra.mxu0 %v1345
        %1379 = vmatprep.subr.bf16.mxu0 %v1348
        %1380 = vmatpush1.bf16.xpose.msra.mxu0 %v1347
        %1381 = vmatprep.subr.bf16.mxu0 %v1350
        %1382 = vmatpush1.bf16.xpose.msra.mxu0 %v1349
        %1383 = vmatprep.subr.bf16.mxu0 %v1352
        %1384 = vmatpush1.bf16.xpose.msra.mxu0 %v1351
        %1385 = vmatprep.subr.bf16.mxu0 %v1354
        %1386 = vmatpush1.bf16.xpose.msra.mxu0 %v1353
        %1387 = vmatprep.subr.bf16.mxu0 %v1356
        %1388 = vmatpush1.bf16.xpose.msra.mxu0 %v1355
        %1389 = vmatprep.subr.bf16.mxu0 %v1358
        %1390 = vmatpush1.bf16.xpose.msra.mxu0 %v1357
        %1391 = vmatprep.subr.bf16.mxu0 %v1360
        %1392 = vmatpush1.bf16.xpose.msra.mxu0 %v1359
        %1393 = vmatprep.subr.bf16.mxu0 %v1362
        %1394 = vmatpush1.bf16.xpose.msra.mxu0 %v1361
        %1395 = vmatprep.subr.bf16.mxu0 %v1364
        %1396 = vmatpush1.bf16.xpose.msra.mxu0 %v1363
        %1397 = vmatprep.subr.bf16.mxu0 %v1366
        %1398 = vmatpush1.bf16.xpose.msra.mxu0 %v1365
        %1399 = vmatprep.subr.bf16.mxu0 %v1368
        %1400 = vmatpush1.bf16.xpose.msra.mxu0 %v1367
        %1401 = vmatprep.subr.bf16.mxu0 %v1370
        %1402 = vmatpush1.bf16.xpose.msra.mxu0 %v1369
        %1403 = vmatprep.subr.bf16.mxu0 %v1372
        %1404 = vmatpush1.bf16.xpose.msra.mxu0 %v1371
        %1405 = vmatprep.subr.bf16.mxu0 %v1374
        %1406 = vmatpush1.bf16.xpose.msra.mxu0 %v1373
        %1407 = vmatprep.subr.bf16.mxu0 %v1376
        %1408 = vmatpush1.bf16.xpose.msra.mxu0 %v1375
        %1409 = vmatprep.mubr.bf16.mxu0 %v611
        %1410 = vmatmul.mubr.bf16.gmra.mrb[0].mxu0 %v610
        %v1411 = vpop.f32.mrb[0].mxu0
        %v1412 = vadd.f32 0.0, %v1411
        %v1413 = vpop.f32.mrb[0].mxu0
        %v1414 = vadd.f32 0.0, %v1413
        %v1415 = vpop.f32.mrb[0].mxu0
        %v1416 = vpop.f32.mrb[0].mxu0
        %1417 = vdwg.mxu0
        %v1418 = vld [vmem:[%s6] sm:$0xff]
        %v1419 = vld [vmem:[%s7] sm:$0xff]
        %1421 = vset.pattern.permute.xlu0 0
        %1422 = vperm.xlu0 %1421, %v1419
        %v1423 = vpop.permute.xlu0 %1422
        %v1426 = vsel %vm616, %v1418, 0
        %vm1428 = vcmask 1043456
        %v1430 = vsel %vm1428, %v1412, 0
        %v1433 = vsel %vm1428, %v1414, 0
        %1435 = vmatprep.subr.mxu0 %v1433
        %1436 = vmatpush1.msra.mxu0 %v1430
        %1437 = vmatprep.subr.mxu0 0.0
        %1438 = vmatpush1.msra.mxu0 0.0
        %1439 = vmatprep.subr.mxu0 0.0
        %1440 = vmatpush1.msra.mxu0 0.0
        %1441 = vmatprep.subr.mxu0 0.0
        %1442 = vmatpush1.msra.mxu0 0.0
        %1443 = vmatprep.subr.mxu0 0.0
        %1444 = vmatpush1.msra.mxu0 0.0
        %1445 = vmatprep.subr.mxu0 0.0
        %1446 = vmatpush1.msra.mxu0 0.0
        %1447 = vmatprep.subr.mxu0 0.0
        %1448 = vmatpush1.msra.mxu0 0.0
        %1449 = vmatprep.subr.mxu0 0.0
        %1450 = vmatpush1.msra.mxu0 0.0
        %1451 = vmatprep.subr.mxu0 0.0
        %1452 = vmatpush1.msra.mxu0 0.0
        %1453 = vmatprep.subr.mxu0 0.0
        %1454 = vmatpush1.msra.mxu0 0.0
        %1455 = vmatprep.subr.mxu0 0.0
        %1456 = vmatpush1.msra.mxu0 0.0
        %1457 = vmatprep.subr.mxu0 0.0
        %1458 = vmatpush1.msra.mxu0 0.0
        %1459 = vmatprep.subr.mxu0 0.0
        %1460 = vmatpush1.msra.mxu0 0.0
        %1461 = vmatprep.subr.mxu0 0.0
        %1462 = vmatpush1.msra.mxu0 0.0
        %1463 = vmatprep.subr.mxu0 0.0
        %1464 = vmatpush1.msra.mxu0 0.0
        %1465 = vmatprep.subr.mxu0 0.0
        %1466 = vmatpush1.msra.mxu0 0.0
        %1467 = vmatprep.subr.mxu0 0.0
        %1468 = vmatpush1.msra.mxu0 0.0
        %1469 = vmatprep.subr.mxu0 0.0
        %1470 = vmatpush1.msra.mxu0 0.0
        %1471 = vmatprep.subr.mxu0 0.0
        %1472 = vmatpush1.msra.mxu0 0.0
        %1473 = vmatprep.subr.mxu0 0.0
        %1474 = vmatpush1.msra.mxu0 0.0
        %1475 = vmatprep.subr.mxu0 0.0
        %1476 = vmatpush1.msra.mxu0 0.0
        %1477 = vmatprep.subr.mxu0 0.0
        %1478 = vmatpush1.msra.mxu0 0.0
        %1479 = vmatprep.subr.mxu0 0.0
        %1480 = vmatpush1.msra.mxu0 0.0
        %1481 = vmatprep.subr.mxu0 0.0
        %1482 = vmatpush1.msra.mxu0 0.0
        %1483 = vmatprep.subr.mxu0 0.0
        %1484 = vmatpush1.msra.mxu0 0.0
        %1485 = vmatprep.subr.mxu0 0.0
        %1486 = vmatpush1.msra.mxu0 0.0
        %1487 = vmatprep.subr.mxu0 0.0
        %1488 = vmatpush1.msra.mxu0 0.0
        %1489 = vmatprep.subr.mxu0 0.0
        %1490 = vmatpush1.msra.mxu0 0.0
        %1491 = vmatprep.subr.mxu0 0.0
        %1492 = vmatpush1.msra.mxu0 0.0
        %1493 = vmatprep.subr.mxu0 0.0
        %1494 = vmatpush1.msra.mxu0 0.0
        %1495 = vmatprep.subr.mxu0 0.0
        %1496 = vmatpush1.msra.mxu0 0.0
        %1497 = vmatprep.subr.mxu0 0.0
        %1498 = vmatpush1.msra.mxu0 0.0
        %1499 = vmatprep.mubr.f32.mxu0 0.0
        %1500 = vmatmul.mubr.f32.gmra.mrb[0].mxu0 %v1426
        %v1501 = vpop.f32.mrb[0].mxu0
        %v1502 = vadd.f32 %v1423, %v1501
        %v1503 = vpop.f32.mrb[0].mxu0
        %v1504 = vadd.f32 %v1423, %v1503
        %1505 = vdwg.mxu0
        %v1506 = vadd.f32 %v1502, %v365
        %v1507 = vadd.f32 %v1504, %v366
        %1508 = vst [vmem:[%s354] sm:$0xff] %v1506
        %1509 = vst [vmem:[%s354 + $0x8] sm:$0xff] %v1507
        %s1510 = sand.u32 %s227, 1
        %s1511 = scalar_lea.sflag [#allocation4], %s1510
        %s1512 = sand.u32 %s227, 1
        %s1513 = smul.addr %s1512, 16
        %s1514 = scalar_lea.vmem [#allocation5], %s1513
        // Predicated region
        $region57: #{tpu_custom_call.1} parent=51 // pred_check
          %p1515 = pneg %p237
        $region58: #{tpu_custom_call.1} parent=51 // pred_check_branch
          %1517 = sbr.rel (%p1515) target = $region60
        $region59: #{tpu_custom_call.1} parent=51 // pred_region
          %s1518 = smul.u32 2, %s30
          %s1520 = ssub.s32 256, 256
          %1521 = vsyncadd %s1511, %s1520
          %s1522 = smul.addr %s29, 2
          %s1523 = sadd.s32 %s1518, %s1522
          %s1524 = smul.addr %s1523, 128
          %s1525 = scalar_lea.hbm %s8, %s1524
          %s1527 = sshll.u32 %s1514, 4
          %s1528 = int_to_ptr.vmem [resolvable:$true] %s1527
          %1530 = dma.vmem_to_hbm [thread:$0]  %s1528, 256, %s1525, %s1511
        $region60: #{tpu_custom_call.1} parent=51 // pred_fallthru
          _
      $region52: #{tpu_custom_call.1} parent=5 // pred_fallthru
        _
      %p1531 = scmp.le.s32.totalorder 2, %s20
      // Predicated region
      $region61: #{tpu_custom_call.1} parent=5 // pred_check
        %p1532 = pneg %p1531
      $region62: #{tpu_custom_call.1} parent=5 // pred_check_branch
        %1534 = sbr.rel (%p1532) target = $region64
      $region63: #{tpu_custom_call.1} parent=5 // pred_region
        %s1535 = ssub.s32 %s20, 2
        // Predicated region
        $region65: #{tpu_custom_call.1} parent=63 // pred_check
          %p1536 = pneg %p243
        $region66: #{tpu_custom_call.1} parent=63 // pred_check_branch
          %1538 = sbr.rel (%p1536) target = $region68
        $region67: #{tpu_custom_call.1} parent=63 // pred_region
          %s1539 = sand.u32 %s228, 1
          %s1540 = scalar_lea.sflag [#allocation4], %s1539
          %s1541 = sand.u32 %s228, 1
          %s1542 = smul.addr %s1541, 16
          %s1543 = scalar_lea.vmem [#allocation5], %s1542
          %1544 = dma.done %s1540, 256
        $region68: #{tpu_custom_call.1} parent=63 // pred_fallthru
          _
      $region64: #{tpu_custom_call.1} parent=5 // pred_fallthru
        _
    $region6: #{tpu_custom_call.1} parent=1 // loop_footer
      %s24 = sadd.s32 1, %s20
    $region7: #{tpu_custom_call.1} parent=1 // loop_footer_branch
      %19 = sbr.rel target = $region3
    $region8: #{tpu_custom_call.1} parent=1 // loop_exit
      _
    %1545 = vsyncpa [#allocation3], 1
    %s1546 = scalar_lea.sflag [#allocation3], 1
    %1547 = vsyncpa %s1546, 1
    %1548 = vsyncpa [#allocation4], 1
    %s1549 = scalar_lea.sflag [#allocation4], 1
    %1550 = vsyncpa %s1549, 1

</llo_original>
